<compile_context>
chip_gen: v7x
topology: tpu7x:2x2x1
jax: 0.10.0
libtpu: 0.0.40
codegen_flags: <defaults>
</compile_context>

<pallas_src>
import functools

import jax
import jax.numpy as jnp
from jax.experimental import pallas as pl
from jax.experimental.pallas import tpu as pltpu


# ---------------------------------------------------------------------------
# Shared math (used by both the Pallas kernel body and the pure-JAX reference)
# ---------------------------------------------------------------------------

def _mxu(a, b):
    """a @ b with bf16 operands and f32 accumulation (MXU friendly)."""
    return jax.lax.dot_general(
        a.astype(jnp.bfloat16), b.astype(jnp.bfloat16),
        dimension_numbers=(((a.ndim - 1,), (0,)), ((), ())),
        preferred_element_type=jnp.float32)


def _mxu_nt(a, b):
    """a @ b.T (contract last dims of both) with bf16 operands, f32 acc."""
    return jax.lax.dot_general(
        a.astype(jnp.bfloat16), b.astype(jnp.bfloat16),
        dimension_numbers=(((1,), (1,)), ((), ())),
        preferred_element_type=jnp.float32)


def _gelu(x):
    # tanh approximation of GELU.
    return 0.5 * x * (1.0 + jnp.tanh(0.7978845608028654
                                     * (x + 0.044715 * x * x * x)))


def _layernorm(x, gamma, beta, eps):
    mean = jnp.mean(x, axis=-1, keepdims=True)
    c = x - mean
    var = jnp.mean(c * c, axis=-1, keepdims=True)
    return c * jax.lax.rsqrt(var + eps) * gamma + beta


def _bert_layer_seq(x, mask, wq, bq, wk, bk, wv, bv, wo, bo,
                    g1, b1, wi, bi, wo2, bo2, g2, b2, *, num_heads, eps):
    """One sequence of BertLayer.forward. x: (S, H) f32, mask: (1, S) additive."""
    S, H = x.shape
    d_head = H // num_heads
    scale = 1.0 / float(d_head) ** 0.5

    # --- multi-head self attention --------------------------------------
    q = _mxu(x, wq) + bq
    k = _mxu(x, wk) + bk
    v = _mxu(x, wv) + bv

    ctx = []
    for h in range(num_heads):
        sl = slice(h * d_head, (h + 1) * d_head)
        s = _mxu_nt(q[:, sl], k[:, sl]) * scale + mask          # (S, S)
        s = s - jnp.max(s, axis=-1, keepdims=True)
        p = jnp.exp(s)
        p = p / jnp.sum(p, axis=-1, keepdims=True)
        # TODO(synk): attention-probs dropout / head_mask = identity.
        ctx.append(_mxu(p, v[:, sl]))                           # (S, d_head)
    ctx = jnp.concatenate(ctx, axis=-1)                         # (S, H)

    # --- attention output: dense + (dropout) + add & layer-norm ----------
    attn = _mxu(ctx, wo) + bo
    h1 = _layernorm(attn + x, g1, b1, eps)

    # --- intermediate (dense + GELU) + output (dense + add & layer-norm) -
    inter = _gelu(_mxu(h1, wi) + bi)
    out = _mxu(inter, wo2) + bo2
    return _layernorm(out + h1, g2, b2, eps)


# ---------------------------------------------------------------------------
# Pallas kernel
# ---------------------------------------------------------------------------

def bert_layer_kernel(x_ref, mask_ref,
                      wq_ref, bq_ref, wk_ref, bk_ref, wv_ref, bv_ref,
                      wo_ref, bo_ref, g1_ref, b1_ref,
                      wi_ref, bi_ref, wo2_ref, bo2_ref, g2_ref, b2_ref,
                      out_ref, *, num_heads, eps):
    out_ref[0] = _bert_layer_seq(
        x_ref[0], mask_ref[0],
        wq_ref[...], bq_ref[...], wk_ref[...], bk_ref[...],
        wv_ref[...], bv_ref[...], wo_ref[...], bo_ref[...],
        g1_ref[...], b1_ref[...],
        wi_ref[...], bi_ref[...], wo2_ref[...], bo2_ref[...],
        g2_ref[...], b2_ref[...],
        num_heads=num_heads, eps=eps).astype(out_ref.dtype)


def bert_layer(hidden_states, params, *, num_heads, eps, attention_mask=None):
    """JAX wrapper mirroring BertLayer.forward (returns layer_output only)."""
    B, S, H = hidden_states.shape
    I = params["wi"].shape[1]

    x = hidden_states.astype(jnp.float32)
    if attention_mask is None:
        mask = jnp.zeros((B, 1, S), jnp.float32)
    else:
        mask = attention_mask.reshape(B, 1, S).astype(jnp.float32)

    bf16, f32 = jnp.bfloat16, jnp.float32
    w = lambda name: params[name].astype(bf16)                 # matmul weights
    vec = lambda name, n: params[name].reshape(1, n).astype(f32)

    def full(shape):
        return pl.BlockSpec(shape, lambda b, s=len(shape): (0,) * s)

    in_specs = [
        pl.BlockSpec((1, S, H), lambda b: (b, 0, 0)),          # hidden_states
        pl.BlockSpec((1, 1, S), lambda b: (b, 0, 0)),          # additive mask
        full((H, H)), full((1, H)),                            # wq, bq
        full((H, H)), full((1, H)),                            # wk, bk
        full((H, H)), full((1, H)),                            # wv, bv
        full((H, H)), full((1, H)),                            # wo, bo
        full((1, H)), full((1, H)),                            # ln1 gamma/beta
        full((H, I)), full((1, I)),                            # wi, bi
        full((I, H)), full((1, H)),                            # wo2, bo2
        full((1, H)), full((1, H)),                            # ln2 gamma/beta
    ]
    out_spec = pl.BlockSpec((1, S, H), lambda b: (b, 0, 0))

    flops = B * (8 * S * H * H + 4 * S * S * H + 4 * S * H * I)
    transcendentals = B * (num_heads * S * S + S * I)
    bytes_accessed = (2 * B * S * H * 4 + B * S * 4
                      + (4 * H * H + 2 * H * I) * 2
                      + (9 * H + I) * 4)

    out = pl.pallas_call(
        functools.partial(bert_layer_kernel, num_heads=num_heads, eps=eps),
        out_shape=jax.ShapeDtypeStruct((B, S, H), jnp.float32),
        grid=(B,),
        in_specs=in_specs,
        out_specs=out_spec,
        compiler_params=pltpu.CompilerParams(
            dimension_semantics=("parallel",)),
        cost_estimate=pl.CostEstimate(flops=flops,
                                      transcendentals=transcendentals,
                                      bytes_accessed=bytes_accessed),
    )(x, mask,
      w("wq"), vec("bq", H), w("wk"), vec("bk", H),
      w("wv"), vec("bv", H), w("wo"), vec("bo", H),
      vec("ln1_w", H), vec("ln1_b", H),
      w("wi"), vec("bi", I), w("wo2"), vec("bo2", H),
      vec("ln2_w", H), vec("ln2_b", H))
    return out


# ---------------------------------------------------------------------------
# Pure-JAX reference (same math, same bf16 matmul operands)
# ---------------------------------------------------------------------------

def bert_layer_reference(hidden_states, params, *, num_heads, eps,
                         attention_mask=None):
    B, S, H = hidden_states.shape
    I = params["wi"].shape[1]
    x = hidden_states.astype(jnp.float32)
    if attention_mask is None:
        mask = jnp.zeros((B, 1, S), jnp.float32)
    else:
        mask = attention_mask.reshape(B, 1, S).astype(jnp.float32)

    def one(xb, mb):
        return _bert_layer_seq(
            xb, mb,
            params["wq"], params["bq"].reshape(1, H),
            params["wk"], params["bk"].reshape(1, H),
            params["wv"], params["bv"].reshape(1, H),
            params["wo"], params["bo"].reshape(1, H),
            params["ln1_w"].reshape(1, H), params["ln1_b"].reshape(1, H),
            params["wi"], params["bi"].reshape(1, I),
            params["wo2"], params["bo2"].reshape(1, H),
            params["ln2_w"].reshape(1, H), params["ln2_b"].reshape(1, H),
            num_heads=num_heads, eps=eps)

    return jax.vmap(one)(x, mask)


def init_params(key, hidden_size, intermediate_size):
    H, I = hidden_size, intermediate_size
    ks = jax.random.split(key, 12)
    s = 0.02
    dense = lambda k, shape: s * jax.random.normal(k, shape, jnp.float32)
    return {
        "wq": dense(ks[0], (H, H)), "bq": dense(ks[1], (H,)),
        "wk": dense(ks[2], (H, H)), "bk": dense(ks[3], (H,)),
        "wv": dense(ks[4], (H, H)), "bv": dense(ks[5], (H,)),
        "wo": dense(ks[6], (H, H)), "bo": dense(ks[7], (H,)),
        "ln1_w": jnp.ones((H,), jnp.float32),
        "ln1_b": jnp.zeros((H,), jnp.float32),
        "wi": dense(ks[8], (H, I)), "bi": dense(ks[9], (I,)),
        "wo2": dense(ks[10], (I, H)), "bo2": dense(ks[11], (H,)),
        "ln2_w": jnp.ones((H,), jnp.float32),
        "ln2_b": jnp.zeros((H,), jnp.float32),
    }


if __name__ == "__main__":
    B, S, H = 2, 16, 128          # H multiple of 128 -> lane-dense stores
    NUM_HEADS = 4                 # head_dim = 32
    INTERMEDIATE = 256
    EPS = 1e-12

    key = jax.random.PRNGKey(0)
    pkey, xkey = jax.random.split(key)
    params = init_params(pkey, H, INTERMEDIATE)
    hidden_states = 0.5 * jax.random.normal(xkey, (B, S, H), jnp.float32)

    out = bert_layer(hidden_states, params, num_heads=NUM_HEADS, eps=EPS)
    jax.block_until_ready(out)

    ref = bert_layer_reference(hidden_states, params,
                               num_heads=NUM_HEADS, eps=EPS)
    err = jnp.max(jnp.abs(out - ref))
    assert out.shape == (B, S, H)
    assert err < 2e-3, err

    print("KERNEL_OK")
</pallas_src>

<mosaic_0001>
module attributes {stable_mosaic.version = 11 : i64} {
  func.func @bert_layer_kernel(%arg0: i32, %arg1: memref<1x16x128xf32, #tpu.memory_space<vmem>>, %arg2: memref<1x1x16xf32, #tpu.memory_space<vmem>>, %arg3: memref<128x128xbf16, #tpu.memory_space<vmem>>, %arg4: memref<1x128xf32, #tpu.memory_space<vmem>>, %arg5: memref<128x128xbf16, #tpu.memory_space<vmem>>, %arg6: memref<1x128xf32, #tpu.memory_space<vmem>>, %arg7: memref<128x128xbf16, #tpu.memory_space<vmem>>, %arg8: memref<1x128xf32, #tpu.memory_space<vmem>>, %arg9: memref<128x128xbf16, #tpu.memory_space<vmem>>, %arg10: memref<1x128xf32, #tpu.memory_space<vmem>>, %arg11: memref<1x128xf32, #tpu.memory_space<vmem>>, %arg12: memref<1x128xf32, #tpu.memory_space<vmem>>, %arg13: memref<128x256xbf16, #tpu.memory_space<vmem>>, %arg14: memref<1x256xf32, #tpu.memory_space<vmem>>, %arg15: memref<256x128xbf16, #tpu.memory_space<vmem>>, %arg16: memref<1x128xf32, #tpu.memory_space<vmem>>, %arg17: memref<1x128xf32, #tpu.memory_space<vmem>>, %arg18: memref<1x128xf32, #tpu.memory_space<vmem>>, %arg19: memref<1x16x128xf32, #tpu.memory_space<vmem>>) attributes {dimension_semantics = [#tpu.dimension_semantics<parallel>], iteration_bounds = array<i64: 2>, scalar_prefetch = 0 : i64, scratch_operands = 0 : i64, tpu.core_type = #tpu.core_type<tc>, window_params = [{transform_indices = @transform_0, window_bounds = array<i64: 1, 16, 128>}, {transform_indices = @transform_1, window_bounds = array<i64: 1, 1, 16>}, {pipeline_mode = #tpu.pipeline_mode<synchronous>, transform_indices = @transform_2, window_bounds = array<i64: 128, 128>}, {pipeline_mode = #tpu.pipeline_mode<synchronous>, transform_indices = @transform_3, window_bounds = array<i64: 1, 128>}, {pipeline_mode = #tpu.pipeline_mode<synchronous>, transform_indices = @transform_4, window_bounds = array<i64: 128, 128>}, {pipeline_mode = #tpu.pipeline_mode<synchronous>, transform_indices = @transform_5, window_bounds = array<i64: 1, 128>}, {pipeline_mode = #tpu.pipeline_mode<synchronous>, transform_indices = @transform_6, window_bounds = array<i64: 128, 128>}, {pipeline_mode = #tpu.pipeline_mode<synchronous>, transform_indices = @transform_7, window_bounds = array<i64: 1, 128>}, {pipeline_mode = #tpu.pipeline_mode<synchronous>, transform_indices = @transform_8, window_bounds = array<i64: 128, 128>}, {pipeline_mode = #tpu.pipeline_mode<synchronous>, transform_indices = @transform_9, window_bounds = array<i64: 1, 128>}, {pipeline_mode = #tpu.pipeline_mode<synchronous>, transform_indices = @transform_10, window_bounds = array<i64: 1, 128>}, {pipeline_mode = #tpu.pipeline_mode<synchronous>, transform_indices = @transform_11, window_bounds = array<i64: 1, 128>}, {pipeline_mode = #tpu.pipeline_mode<synchronous>, transform_indices = @transform_12, window_bounds = array<i64: 128, 256>}, {pipeline_mode = #tpu.pipeline_mode<synchronous>, transform_indices = @transform_13, window_bounds = array<i64: 1, 256>}, {pipeline_mode = #tpu.pipeline_mode<synchronous>, transform_indices = @transform_14, window_bounds = array<i64: 256, 128>}, {pipeline_mode = #tpu.pipeline_mode<synchronous>, transform_indices = @transform_15, window_bounds = array<i64: 1, 128>}, {pipeline_mode = #tpu.pipeline_mode<synchronous>, transform_indices = @transform_16, window_bounds = array<i64: 1, 128>}, {pipeline_mode = #tpu.pipeline_mode<synchronous>, transform_indices = @transform_17, window_bounds = array<i64: 1, 128>}, {transform_indices = @transform_18, window_bounds = array<i64: 1, 16, 128>}]} {
    %c0 = arith.constant 0 : index
    %c0_0 = arith.constant 0 : index
    %c0_1 = arith.constant 0 : index
    %0 = vector.load %arg1[%c0, %c0_0, %c0_1] : memref<1x16x128xf32, #tpu.memory_space<vmem>>, vector<1x16x128xf32>
    %1 = vector.shape_cast %0 : vector<1x16x128xf32> to vector<16x128xf32>
    %c0_2 = arith.constant 0 : index
    %c0_3 = arith.constant 0 : index
    %c0_4 = arith.constant 0 : index
    %2 = vector.load %arg2[%c0_2, %c0_3, %c0_4] : memref<1x1x16xf32, #tpu.memory_space<vmem>>, vector<1x1x16xf32>
    %3 = vector.shape_cast %2 : vector<1x1x16xf32> to vector<1x16xf32>
    %c0_5 = arith.constant 0 : index
    %c0_6 = arith.constant 0 : index
    %4 = vector.load %arg3[%c0_5, %c0_6] : memref<128x128xbf16, #tpu.memory_space<vmem>>, vector<128x128xbf16>
    %c0_7 = arith.constant 0 : index
    %c0_8 = arith.constant 0 : index
    %5 = vector.load %arg4[%c0_7, %c0_8] : memref<1x128xf32, #tpu.memory_space<vmem>>, vector<1x128xf32>
    %c0_9 = arith.constant 0 : index
    %c0_10 = arith.constant 0 : index
    %6 = vector.load %arg5[%c0_9, %c0_10] : memref<128x128xbf16, #tpu.memory_space<vmem>>, vector<128x128xbf16>
    %c0_11 = arith.constant 0 : index
    %c0_12 = arith.constant 0 : index
    %7 = vector.load %arg6[%c0_11, %c0_12] : memref<1x128xf32, #tpu.memory_space<vmem>>, vector<1x128xf32>
    %c0_13 = arith.constant 0 : index
    %c0_14 = arith.constant 0 : index
    %8 = vector.load %arg7[%c0_13, %c0_14] : memref<128x128xbf16, #tpu.memory_space<vmem>>, vector<128x128xbf16>
    %c0_15 = arith.constant 0 : index
    %c0_16 = arith.constant 0 : index
    %9 = vector.load %arg8[%c0_15, %c0_16] : memref<1x128xf32, #tpu.memory_space<vmem>>, vector<1x128xf32>
    %c0_17 = arith.constant 0 : index
    %c0_18 = arith.constant 0 : index
    %10 = vector.load %arg9[%c0_17, %c0_18] : memref<128x128xbf16, #tpu.memory_space<vmem>>, vector<128x128xbf16>
    %c0_19 = arith.constant 0 : index
    %c0_20 = arith.constant 0 : index
    %11 = vector.load %arg10[%c0_19, %c0_20] : memref<1x128xf32, #tpu.memory_space<vmem>>, vector<1x128xf32>
    %c0_21 = arith.constant 0 : index
    %c0_22 = arith.constant 0 : index
    %12 = vector.load %arg11[%c0_21, %c0_22] : memref<1x128xf32, #tpu.memory_space<vmem>>, vector<1x128xf32>
    %c0_23 = arith.constant 0 : index
    %c0_24 = arith.constant 0 : index
    %13 = vector.load %arg12[%c0_23, %c0_24] : memref<1x128xf32, #tpu.memory_space<vmem>>, vector<1x128xf32>
    %c0_25 = arith.constant 0 : index
    %c0_26 = arith.constant 0 : index
    %14 = vector.load %arg13[%c0_25, %c0_26] : memref<128x256xbf16, #tpu.memory_space<vmem>>, vector<128x256xbf16>
    %c0_27 = arith.constant 0 : index
    %c0_28 = arith.constant 0 : index
    %15 = vector.load %arg14[%c0_27, %c0_28] : memref<1x256xf32, #tpu.memory_space<vmem>>, vector<1x256xf32>
    %c0_29 = arith.constant 0 : index
    %c0_30 = arith.constant 0 : index
    %16 = vector.load %arg15[%c0_29, %c0_30] : memref<256x128xbf16, #tpu.memory_space<vmem>>, vector<256x128xbf16>
    %c0_31 = arith.constant 0 : index
    %c0_32 = arith.constant 0 : index
    %17 = vector.load %arg16[%c0_31, %c0_32] : memref<1x128xf32, #tpu.memory_space<vmem>>, vector<1x128xf32>
    %c0_33 = arith.constant 0 : index
    %c0_34 = arith.constant 0 : index
    %18 = vector.load %arg17[%c0_33, %c0_34] : memref<1x128xf32, #tpu.memory_space<vmem>>, vector<1x128xf32>
    %c0_35 = arith.constant 0 : index
    %c0_36 = arith.constant 0 : index
    %19 = vector.load %arg18[%c0_35, %c0_36] : memref<1x128xf32, #tpu.memory_space<vmem>>, vector<1x128xf32>
    %20 = arith.truncf %1 : vector<16x128xf32> to vector<16x128xbf16>
    %cst = arith.constant dense<0.000000e+00> : vector<16x128xf32>
    %21 = tpu.matmul %20, %4, %cst {dimension_numbers = #tpu.dot_dimension_numbers<[1], [0], [0], [1], [0, 0, 1, 1], [], []>} : vector<16x128xbf16>, vector<128x128xbf16>, vector<16x128xf32> -> vector<16x128xf32>
    %22 = vector.broadcast %5 : vector<1x128xf32> to vector<16x128xf32>
    %23 = arith.addf %21, %22 : vector<16x128xf32>
    %24 = arith.truncf %1 : vector<16x128xf32> to vector<16x128xbf16>
    %cst_37 = arith.constant dense<0.000000e+00> : vector<16x128xf32>
    %25 = tpu.matmul %24, %6, %cst_37 {dimension_numbers = #tpu.dot_dimension_numbers<[1], [0], [0], [1], [0, 0, 1, 1], [], []>} : vector<16x128xbf16>, vector<128x128xbf16>, vector<16x128xf32> -> vector<16x128xf32>
    %26 = vector.broadcast %7 : vector<1x128xf32> to vector<16x128xf32>
    %27 = arith.addf %25, %26 : vector<16x128xf32>
    %28 = arith.truncf %1 : vector<16x128xf32> to vector<16x128xbf16>
    %cst_38 = arith.constant dense<0.000000e+00> : vector<16x128xf32>
    %29 = tpu.matmul %28, %8, %cst_38 {dimension_numbers = #tpu.dot_dimension_numbers<[1], [0], [0], [1], [0, 0, 1, 1], [], []>} : vector<16x128xbf16>, vector<128x128xbf16>, vector<16x128xf32> -> vector<16x128xf32>
    %30 = vector.broadcast %9 : vector<1x128xf32> to vector<16x128xf32>
    %31 = arith.addf %29, %30 : vector<16x128xf32>
    %32 = vector.extract_strided_slice %23 {offsets = [0, 0], sizes = [16, 32], strides = [1, 1]} : vector<16x128xf32> to vector<16x32xf32>
    %33 = vector.extract_strided_slice %27 {offsets = [0, 0], sizes = [16, 32], strides = [1, 1]} : vector<16x128xf32> to vector<16x32xf32>
    %34 = arith.truncf %32 : vector<16x32xf32> to vector<16x32xbf16>
    %35 = arith.truncf %33 : vector<16x32xf32> to vector<16x32xbf16>
    %cst_39 = arith.constant dense<0.000000e+00> : vector<16x16xf32>
    %36 = tpu.matmul %34, %35, %cst_39 {dimension_numbers = #tpu.dot_dimension_numbers<[1], [1], [0], [0], [0, 0, 1, 0], [], []>} : vector<16x32xbf16>, vector<16x32xbf16>, vector<16x16xf32> -> vector<16x16xf32>
    %cst_40 = arith.constant 0.176776692 : f32
    %37 = vector.broadcast %cst_40 : f32 to vector<16x16xf32>
    %38 = arith.mulf %36, %37 : vector<16x16xf32>
    %39 = vector.broadcast %3 : vector<1x16xf32> to vector<16x16xf32>
    %40 = arith.addf %38, %39 : vector<16x16xf32>
    %cst_41 = arith.constant dense<0xFF800000> : vector<16xf32>
    %41 = vector.multi_reduction <maximumf>, %40, %cst_41 [1] : vector<16x16xf32> to vector<16xf32>
    %42 = vector.shape_cast %41 : vector<16xf32> to vector<16x1xf32>
    %43 = vector.broadcast %42 : vector<16x1xf32> to vector<16x16xf32>
    %44 = arith.subf %40, %43 : vector<16x16xf32>
    %45 = math.exp %44 : vector<16x16xf32>
    %cst_42 = arith.constant dense<0.000000e+00> : vector<16xf32>
    %46 = vector.multi_reduction <add>, %45, %cst_42 [1] : vector<16x16xf32> to vector<16xf32>
    %47 = vector.shape_cast %46 : vector<16xf32> to vector<16x1xf32>
    %48 = vector.broadcast %47 : vector<16x1xf32> to vector<16x16xf32>
    %49 = arith.divf %45, %48 : vector<16x16xf32>
    %50 = vector.extract_strided_slice %31 {offsets = [0, 0], sizes = [16, 32], strides = [1, 1]} : vector<16x128xf32> to vector<16x32xf32>
    %51 = arith.truncf %49 : vector<16x16xf32> to vector<16x16xbf16>
    %52 = arith.truncf %50 : vector<16x32xf32> to vector<16x32xbf16>
    %cst_43 = arith.constant dense<0.000000e+00> : vector<16x32xf32>
    %53 = tpu.matmul %51, %52, %cst_43 {dimension_numbers = #tpu.dot_dimension_numbers<[1], [0], [0], [1], [0, 0, 1, 1], [], []>} : vector<16x16xbf16>, vector<16x32xbf16>, vector<16x32xf32> -> vector<16x32xf32>
    %54 = vector.extract_strided_slice %23 {offsets = [0, 32], sizes = [16, 32], strides = [1, 1]} : vector<16x128xf32> to vector<16x32xf32>
    %55 = vector.extract_strided_slice %27 {offsets = [0, 32], sizes = [16, 32], strides = [1, 1]} : vector<16x128xf32> to vector<16x32xf32>
    %56 = arith.truncf %54 : vector<16x32xf32> to vector<16x32xbf16>
    %57 = arith.truncf %55 : vector<16x32xf32> to vector<16x32xbf16>
    %cst_44 = arith.constant dense<0.000000e+00> : vector<16x16xf32>
    %58 = tpu.matmul %56, %57, %cst_44 {dimension_numbers = #tpu.dot_dimension_numbers<[1], [1], [0], [0], [0, 0, 1, 0], [], []>} : vector<16x32xbf16>, vector<16x32xbf16>, vector<16x16xf32> -> vector<16x16xf32>
    %cst_45 = arith.constant 0.176776692 : f32
    %59 = vector.broadcast %cst_45 : f32 to vector<16x16xf32>
    %60 = arith.mulf %58, %59 : vector<16x16xf32>
    %61 = vector.broadcast %3 : vector<1x16xf32> to vector<16x16xf32>
    %62 = arith.addf %60, %61 : vector<16x16xf32>
    %cst_46 = arith.constant dense<0xFF800000> : vector<16xf32>
    %63 = vector.multi_reduction <maximumf>, %62, %cst_46 [1] : vector<16x16xf32> to vector<16xf32>
    %64 = vector.shape_cast %63 : vector<16xf32> to vector<16x1xf32>
    %65 = vector.broadcast %64 : vector<16x1xf32> to vector<16x16xf32>
    %66 = arith.subf %62, %65 : vector<16x16xf32>
    %67 = math.exp %66 : vector<16x16xf32>
    %cst_47 = arith.constant dense<0.000000e+00> : vector<16xf32>
    %68 = vector.multi_reduction <add>, %67, %cst_47 [1] : vector<16x16xf32> to vector<16xf32>
    %69 = vector.shape_cast %68 : vector<16xf32> to vector<16x1xf32>
    %70 = vector.broadcast %69 : vector<16x1xf32> to vector<16x16xf32>
    %71 = arith.divf %67, %70 : vector<16x16xf32>
    %72 = vector.extract_strided_slice %31 {offsets = [0, 32], sizes = [16, 32], strides = [1, 1]} : vector<16x128xf32> to vector<16x32xf32>
    %73 = arith.truncf %71 : vector<16x16xf32> to vector<16x16xbf16>
    %74 = arith.truncf %72 : vector<16x32xf32> to vector<16x32xbf16>
    %cst_48 = arith.constant dense<0.000000e+00> : vector<16x32xf32>
    %75 = tpu.matmul %73, %74, %cst_48 {dimension_numbers = #tpu.dot_dimension_numbers<[1], [0], [0], [1], [0, 0, 1, 1], [], []>} : vector<16x16xbf16>, vector<16x32xbf16>, vector<16x32xf32> -> vector<16x32xf32>
    %76 = vector.extract_strided_slice %23 {offsets = [0, 64], sizes = [16, 32], strides = [1, 1]} : vector<16x128xf32> to vector<16x32xf32>
    %77 = vector.extract_strided_slice %27 {offsets = [0, 64], sizes = [16, 32], strides = [1, 1]} : vector<16x128xf32> to vector<16x32xf32>
    %78 = arith.truncf %76 : vector<16x32xf32> to vector<16x32xbf16>
    %79 = arith.truncf %77 : vector<16x32xf32> to vector<16x32xbf16>
    %cst_49 = arith.constant dense<0.000000e+00> : vector<16x16xf32>
    %80 = tpu.matmul %78, %79, %cst_49 {dimension_numbers = #tpu.dot_dimension_numbers<[1], [1], [0], [0], [0, 0, 1, 0], [], []>} : vector<16x32xbf16>, vector<16x32xbf16>, vector<16x16xf32> -> vector<16x16xf32>
    %cst_50 = arith.constant 0.176776692 : f32
    %81 = vector.broadcast %cst_50 : f32 to vector<16x16xf32>
    %82 = arith.mulf %80, %81 : vector<16x16xf32>
    %83 = vector.broadcast %3 : vector<1x16xf32> to vector<16x16xf32>
    %84 = arith.addf %82, %83 : vector<16x16xf32>
    %cst_51 = arith.constant dense<0xFF800000> : vector<16xf32>
    %85 = vector.multi_reduction <maximumf>, %84, %cst_51 [1] : vector<16x16xf32> to vector<16xf32>
    %86 = vector.shape_cast %85 : vector<16xf32> to vector<16x1xf32>
    %87 = vector.broadcast %86 : vector<16x1xf32> to vector<16x16xf32>
    %88 = arith.subf %84, %87 : vector<16x16xf32>
    %89 = math.exp %88 : vector<16x16xf32>
    %cst_52 = arith.constant dense<0.000000e+00> : vector<16xf32>
    %90 = vector.multi_reduction <add>, %89, %cst_52 [1] : vector<16x16xf32> to vector<16xf32>
    %91 = vector.shape_cast %90 : vector<16xf32> to vector<16x1xf32>
    %92 = vector.broadcast %91 : vector<16x1xf32> to vector<16x16xf32>
    %93 = arith.divf %89, %92 : vector<16x16xf32>
    %94 = vector.extract_strided_slice %31 {offsets = [0, 64], sizes = [16, 32], strides = [1, 1]} : vector<16x128xf32> to vector<16x32xf32>
    %95 = arith.truncf %93 : vector<16x16xf32> to vector<16x16xbf16>
    %96 = arith.truncf %94 : vector<16x32xf32> to vector<16x32xbf16>
    %cst_53 = arith.constant dense<0.000000e+00> : vector<16x32xf32>
    %97 = tpu.matmul %95, %96, %cst_53 {dimension_numbers = #tpu.dot_dimension_numbers<[1], [0], [0], [1], [0, 0, 1, 1], [], []>} : vector<16x16xbf16>, vector<16x32xbf16>, vector<16x32xf32> -> vector<16x32xf32>
    %98 = vector.extract_strided_slice %23 {offsets = [0, 96], sizes = [16, 32], strides = [1, 1]} : vector<16x128xf32> to vector<16x32xf32>
    %99 = vector.extract_strided_slice %27 {offsets = [0, 96], sizes = [16, 32], strides = [1, 1]} : vector<16x128xf32> to vector<16x32xf32>
    %100 = arith.truncf %98 : vector<16x32xf32> to vector<16x32xbf16>
    %101 = arith.truncf %99 : vector<16x32xf32> to vector<16x32xbf16>
    %cst_54 = arith.constant dense<0.000000e+00> : vector<16x16xf32>
    %102 = tpu.matmul %100, %101, %cst_54 {dimension_numbers = #tpu.dot_dimension_numbers<[1], [1], [0], [0], [0, 0, 1, 0], [], []>} : vector<16x32xbf16>, vector<16x32xbf16>, vector<16x16xf32> -> vector<16x16xf32>
    %cst_55 = arith.constant 0.176776692 : f32
    %103 = vector.broadcast %cst_55 : f32 to vector<16x16xf32>
    %104 = arith.mulf %102, %103 : vector<16x16xf32>
    %105 = vector.broadcast %3 : vector<1x16xf32> to vector<16x16xf32>
    %106 = arith.addf %104, %105 : vector<16x16xf32>
    %cst_56 = arith.constant dense<0xFF800000> : vector<16xf32>
    %107 = vector.multi_reduction <maximumf>, %106, %cst_56 [1] : vector<16x16xf32> to vector<16xf32>
    %108 = vector.shape_cast %107 : vector<16xf32> to vector<16x1xf32>
    %109 = vector.broadcast %108 : vector<16x1xf32> to vector<16x16xf32>
    %110 = arith.subf %106, %109 : vector<16x16xf32>
    %111 = math.exp %110 : vector<16x16xf32>
    %cst_57 = arith.constant dense<0.000000e+00> : vector<16xf32>
    %112 = vector.multi_reduction <add>, %111, %cst_57 [1] : vector<16x16xf32> to vector<16xf32>
    %113 = vector.shape_cast %112 : vector<16xf32> to vector<16x1xf32>
    %114 = vector.broadcast %113 : vector<16x1xf32> to vector<16x16xf32>
    %115 = arith.divf %111, %114 : vector<16x16xf32>
    %116 = vector.extract_strided_slice %31 {offsets = [0, 96], sizes = [16, 32], strides = [1, 1]} : vector<16x128xf32> to vector<16x32xf32>
    %117 = arith.truncf %115 : vector<16x16xf32> to vector<16x16xbf16>
    %118 = arith.truncf %116 : vector<16x32xf32> to vector<16x32xbf16>
    %cst_58 = arith.constant dense<0.000000e+00> : vector<16x32xf32>
    %119 = tpu.matmul %117, %118, %cst_58 {dimension_numbers = #tpu.dot_dimension_numbers<[1], [0], [0], [1], [0, 0, 1, 1], [], []>} : vector<16x16xbf16>, vector<16x32xbf16>, vector<16x32xf32> -> vector<16x32xf32>
    %120 = tpu.concatenate %53, %75, %97, %119 in 1 : vector<16x32xf32>, vector<16x32xf32>, vector<16x32xf32>, vector<16x32xf32> -> vector<16x128xf32>
    %121 = arith.truncf %120 : vector<16x128xf32> to vector<16x128xbf16>
    %cst_59 = arith.constant dense<0.000000e+00> : vector<16x128xf32>
    %122 = tpu.matmul %121, %10, %cst_59 {dimension_numbers = #tpu.dot_dimension_numbers<[1], [0], [0], [1], [0, 0, 1, 1], [], []>} : vector<16x128xbf16>, vector<128x128xbf16>, vector<16x128xf32> -> vector<16x128xf32>
    %123 = vector.broadcast %11 : vector<1x128xf32> to vector<16x128xf32>
    %124 = arith.addf %122, %123 : vector<16x128xf32>
    %125 = arith.addf %124, %1 : vector<16x128xf32>
    %cst_60 = arith.constant dense<0.000000e+00> : vector<16xf32>
    %126 = vector.multi_reduction <add>, %125, %cst_60 [1] : vector<16x128xf32> to vector<16xf32>
    %127 = vector.shape_cast %126 : vector<16xf32> to vector<16x1xf32>
    %cst_61 = arith.constant 1.280000e+02 : f32
    %128 = vector.broadcast %cst_61 : f32 to vector<16x1xf32>
    %129 = arith.divf %127, %128 : vector<16x1xf32>
    %130 = vector.broadcast %129 : vector<16x1xf32> to vector<16x128xf32>
    %131 = arith.subf %125, %130 : vector<16x128xf32>
    %132 = arith.mulf %131, %131 : vector<16x128xf32>
    %cst_62 = arith.constant dense<0.000000e+00> : vector<16xf32>
    %133 = vector.multi_reduction <add>, %132, %cst_62 [1] : vector<16x128xf32> to vector<16xf32>
    %134 = vector.shape_cast %133 : vector<16xf32> to vector<16x1xf32>
    %cst_63 = arith.constant 1.280000e+02 : f32
    %135 = vector.broadcast %cst_63 : f32 to vector<16x1xf32>
    %136 = arith.divf %134, %135 : vector<16x1xf32>
    %cst_64 = arith.constant 9.99999996E-13 : f32
    %137 = vector.broadcast %cst_64 : f32 to vector<16x1xf32>
    %138 = arith.addf %136, %137 : vector<16x1xf32>
    %139 = math.rsqrt %138 : vector<16x1xf32>
    %140 = vector.broadcast %139 : vector<16x1xf32> to vector<16x128xf32>
    %141 = arith.mulf %131, %140 : vector<16x128xf32>
    %142 = vector.broadcast %12 : vector<1x128xf32> to vector<16x128xf32>
    %143 = arith.mulf %141, %142 : vector<16x128xf32>
    %144 = vector.broadcast %13 : vector<1x128xf32> to vector<16x128xf32>
    %145 = arith.addf %143, %144 : vector<16x128xf32>
    %146 = arith.truncf %145 : vector<16x128xf32> to vector<16x128xbf16>
    %cst_65 = arith.constant dense<0.000000e+00> : vector<16x256xf32>
    %147 = tpu.matmul %146, %14, %cst_65 {dimension_numbers = #tpu.dot_dimension_numbers<[1], [0], [0], [1], [0, 0, 1, 1], [], []>} : vector<16x128xbf16>, vector<128x256xbf16>, vector<16x256xf32> -> vector<16x256xf32>
    %148 = vector.broadcast %15 : vector<1x256xf32> to vector<16x256xf32>
    %149 = arith.addf %147, %148 : vector<16x256xf32>
    %cst_66 = arith.constant 5.000000e-01 : f32
    %150 = vector.broadcast %cst_66 : f32 to vector<16x256xf32>
    %151 = arith.mulf %150, %149 : vector<16x256xf32>
    %cst_67 = arith.constant 4.471500e-02 : f32
    %152 = vector.broadcast %cst_67 : f32 to vector<16x256xf32>
    %153 = arith.mulf %152, %149 : vector<16x256xf32>
    %154 = arith.mulf %153, %149 : vector<16x256xf32>
    %155 = arith.mulf %154, %149 : vector<16x256xf32>
    %156 = arith.addf %149, %155 : vector<16x256xf32>
    %cst_68 = arith.constant 0.797884583 : f32
    %157 = vector.broadcast %cst_68 : f32 to vector<16x256xf32>
    %158 = arith.mulf %157, %156 : vector<16x256xf32>
    %159 = math.tanh %158 : vector<16x256xf32>
    %cst_69 = arith.constant 1.000000e+00 : f32
    %160 = vector.broadcast %cst_69 : f32 to vector<16x256xf32>
    %161 = arith.addf %160, %159 : vector<16x256xf32>
    %162 = arith.mulf %151, %161 : vector<16x256xf32>
    %163 = arith.truncf %162 : vector<16x256xf32> to vector<16x256xbf16>
    %cst_70 = arith.constant dense<0.000000e+00> : vector<16x128xf32>
    %164 = tpu.matmul %163, %16, %cst_70 {dimension_numbers = #tpu.dot_dimension_numbers<[1], [0], [0], [1], [0, 0, 1, 1], [], []>} : vector<16x256xbf16>, vector<256x128xbf16>, vector<16x128xf32> -> vector<16x128xf32>
    %165 = vector.broadcast %17 : vector<1x128xf32> to vector<16x128xf32>
    %166 = arith.addf %164, %165 : vector<16x128xf32>
    %167 = arith.addf %166, %145 : vector<16x128xf32>
    %cst_71 = arith.constant dense<0.000000e+00> : vector<16xf32>
    %168 = vector.multi_reduction <add>, %167, %cst_71 [1] : vector<16x128xf32> to vector<16xf32>
    %169 = vector.shape_cast %168 : vector<16xf32> to vector<16x1xf32>
    %cst_72 = arith.constant 1.280000e+02 : f32
    %170 = vector.broadcast %cst_72 : f32 to vector<16x1xf32>
    %171 = arith.divf %169, %170 : vector<16x1xf32>
    %172 = vector.broadcast %171 : vector<16x1xf32> to vector<16x128xf32>
    %173 = arith.subf %167, %172 : vector<16x128xf32>
    %174 = arith.mulf %173, %173 : vector<16x128xf32>
    %cst_73 = arith.constant dense<0.000000e+00> : vector<16xf32>
    %175 = vector.multi_reduction <add>, %174, %cst_73 [1] : vector<16x128xf32> to vector<16xf32>
    %176 = vector.shape_cast %175 : vector<16xf32> to vector<16x1xf32>
    %cst_74 = arith.constant 1.280000e+02 : f32
    %177 = vector.broadcast %cst_74 : f32 to vector<16x1xf32>
    %178 = arith.divf %176, %177 : vector<16x1xf32>
    %cst_75 = arith.constant 9.99999996E-13 : f32
    %179 = vector.broadcast %cst_75 : f32 to vector<16x1xf32>
    %180 = arith.addf %178, %179 : vector<16x1xf32>
    %181 = math.rsqrt %180 : vector<16x1xf32>
    %182 = vector.broadcast %181 : vector<16x1xf32> to vector<16x128xf32>
    %183 = arith.mulf %173, %182 : vector<16x128xf32>
    %184 = vector.broadcast %18 : vector<1x128xf32> to vector<16x128xf32>
    %185 = arith.mulf %183, %184 : vector<16x128xf32>
    %186 = vector.broadcast %19 : vector<1x128xf32> to vector<16x128xf32>
    %187 = arith.addf %185, %186 : vector<16x128xf32>
    %c0_76 = arith.constant 0 : index
    %c0_77 = arith.constant 0 : index
    %c0_78 = arith.constant 0 : index
    %188 = vector.load %arg19[%c0_76, %c0_77, %c0_78] : memref<1x16x128xf32, #tpu.memory_space<vmem>>, vector<1x16x128xf32>
    %189 = vector.shape_cast %188 : vector<1x16x128xf32> to vector<16x128xf32>
    %190 = vector.shape_cast %187 : vector<16x128xf32> to vector<1x16x128xf32>
    tpu.vector_store %arg19[%c0_76, %c0_77, %c0_78], %190 {strides = array<i32>} : memref<1x16x128xf32, #tpu.memory_space<vmem>>, vector<1x16x128xf32>,
    return
  }
  func.func @transform_0(%arg0: i32) -> (i32, i32, i32) {
    %c0_i32 = arith.constant 0 : i32
    %c0_i32_0 = arith.constant 0 : i32
    %c0_i32_1 = arith.constant 0 : i32
    return %arg0, %c0_i32, %c0_i32_0 : i32, i32, i32
  }
  func.func @transform_1(%arg0: i32) -> (i32, i32, i32) {
    %c0_i32 = arith.constant 0 : i32
    %c0_i32_0 = arith.constant 0 : i32
    %c0_i32_1 = arith.constant 0 : i32
    return %arg0, %c0_i32, %c0_i32_0 : i32, i32, i32
  }
  func.func @transform_2(%arg0: i32) -> (i32, i32) {
    %c0_i32 = arith.constant 0 : i32
    %c0_i32_0 = arith.constant 0 : i32
    %c0_i32_1 = arith.constant 0 : i32
    return %c0_i32, %c0_i32_0 : i32, i32
  }
  func.func @transform_3(%arg0: i32) -> (i32, i32) {
    %c0_i32 = arith.constant 0 : i32
    %c0_i32_0 = arith.constant 0 : i32
    %c0_i32_1 = arith.constant 0 : i32
    return %c0_i32, %c0_i32_0 : i32, i32
  }
  func.func @transform_4(%arg0: i32) -> (i32, i32) {
    %c0_i32 = arith.constant 0 : i32
    %c0_i32_0 = arith.constant 0 : i32
    %c0_i32_1 = arith.constant 0 : i32
    return %c0_i32, %c0_i32_0 : i32, i32
  }
  func.func @transform_5(%arg0: i32) -> (i32, i32) {
    %c0_i32 = arith.constant 0 : i32
    %c0_i32_0 = arith.constant 0 : i32
    %c0_i32_1 = arith.constant 0 : i32
    return %c0_i32, %c0_i32_0 : i32, i32
  }
  func.func @transform_6(%arg0: i32) -> (i32, i32) {
    %c0_i32 = arith.constant 0 : i32
    %c0_i32_0 = arith.constant 0 : i32
    %c0_i32_1 = arith.constant 0 : i32
    return %c0_i32, %c0_i32_0 : i32, i32
  }
  func.func @transform_7(%arg0: i32) -> (i32, i32) {
    %c0_i32 = arith.constant 0 : i32
    %c0_i32_0 = arith.constant 0 : i32
    %c0_i32_1 = arith.constant 0 : i32
    return %c0_i32, %c0_i32_0 : i32, i32
  }
  func.func @transform_8(%arg0: i32) -> (i32, i32) {
    %c0_i32 = arith.constant 0 : i32
    %c0_i32_0 = arith.constant 0 : i32
    %c0_i32_1 = arith.constant 0 : i32
    return %c0_i32, %c0_i32_0 : i32, i32
  }
  func.func @transform_9(%arg0: i32) -> (i32, i32) {
    %c0_i32 = arith.constant 0 : i32
    %c0_i32_0 = arith.constant 0 : i32
    %c0_i32_1 = arith.constant 0 : i32
    return %c0_i32, %c0_i32_0 : i32, i32
  }
  func.func @transform_10(%arg0: i32) -> (i32, i32) {
    %c0_i32 = arith.constant 0 : i32
    %c0_i32_0 = arith.constant 0 : i32
    %c0_i32_1 = arith.constant 0 : i32
    return %c0_i32, %c0_i32_0 : i32, i32
  }
  func.func @transform_11(%arg0: i32) -> (i32, i32) {
    %c0_i32 = arith.constant 0 : i32
    %c0_i32_0 = arith.constant 0 : i32
    %c0_i32_1 = arith.constant 0 : i32
    return %c0_i32, %c0_i32_0 : i32, i32
  }
  func.func @transform_12(%arg0: i32) -> (i32, i32) {
    %c0_i32 = arith.constant 0 : i32
    %c0_i32_0 = arith.constant 0 : i32
    %c0_i32_1 = arith.constant 0 : i32
    return %c0_i32, %c0_i32_0 : i32, i32
  }
  func.func @transform_13(%arg0: i32) -> (i32, i32) {
    %c0_i32 = arith.constant 0 : i32
    %c0_i32_0 = arith.constant 0 : i32
    %c0_i32_1 = arith.constant 0 : i32
    return %c0_i32, %c0_i32_0 : i32, i32
  }
  func.func @transform_14(%arg0: i32) -> (i32, i32) {
    %c0_i32 = arith.constant 0 : i32
    %c0_i32_0 = arith.constant 0 : i32
    %c0_i32_1 = arith.constant 0 : i32
    return %c0_i32, %c0_i32_0 : i32, i32
  }
  func.func @transform_15(%arg0: i32) -> (i32, i32) {
    %c0_i32 = arith.constant 0 : i32
    %c0_i32_0 = arith.constant 0 : i32
    %c0_i32_1 = arith.constant 0 : i32
    return %c0_i32, %c0_i32_0 : i32, i32
  }
  func.func @transform_16(%arg0: i32) -> (i32, i32) {
    %c0_i32 = arith.constant 0 : i32
    %c0_i32_0 = arith.constant 0 : i32
    %c0_i32_1 = arith.constant 0 : i32
    return %c0_i32, %c0_i32_0 : i32, i32
  }
  func.func @transform_17(%arg0: i32) -> (i32, i32) {
    %c0_i32 = arith.constant 0 : i32
    %c0_i32_0 = arith.constant 0 : i32
    %c0_i32_1 = arith.constant 0 : i32
    return %c0_i32, %c0_i32_0 : i32, i32
  }
  func.func @transform_18(%arg0: i32) -> (i32, i32, i32) {
    %c0_i32 = arith.constant 0 : i32
    %c0_i32_0 = arith.constant 0 : i32
    %c0_i32_1 = arith.constant 0 : i32
    return %arg0, %c0_i32, %c0_i32_0 : i32, i32, i32
  }
}

</mosaic_0001>

<llo_original>
// kernel: tpu_custom_call.1
$region0: #{tpu_custom_call.1}
  #allocation0 [shape = 'u32[]', space=smem, size = 0x4, offset = 0x4, fixed_abs, tag = 'smem constant byte address 0x4 - core index']
  #allocation1 [shape = 'u32[144,128]{1,0:T(1,128)}', space=vmem, size = 0x12000, scoped, tag = 'internal scratch']
  %s0 = inlined_call_operand.hbm [shape: f32[2,16,128], index: 0, kind: input, shape index: {}]
  %s1 = inlined_call_operand.vmem [shape: f32[2,1,16], index: 1, kind: input, shape index: {}]
  %s2 = inlined_call_operand.hbm [shape: bf16[128,128], index: 2, kind: input, shape index: {}]
  %s3 = inlined_call_operand.vmem [shape: f32[1,128], index: 3, kind: input, shape index: {}]
  %s4 = inlined_call_operand.hbm [shape: bf16[128,128], index: 4, kind: input, shape index: {}]
  %s5 = inlined_call_operand.vmem [shape: f32[1,128], index: 5, kind: input, shape index: {}]
  %s6 = inlined_call_operand.hbm [shape: bf16[128,128], index: 6, kind: input, shape index: {}]
  %s7 = inlined_call_operand.vmem [shape: f32[1,128], index: 7, kind: input, shape index: {}]
  %s8 = inlined_call_operand.hbm [shape: bf16[128,128], index: 8, kind: input, shape index: {}]
  %s9 = inlined_call_operand.vmem [shape: f32[1,128], index: 9, kind: input, shape index: {}]
  %s10 = inlined_call_operand.vmem [shape: f32[1,128], index: 10, kind: input, shape index: {}]
  %s11 = inlined_call_operand.vmem [shape: f32[1,128], index: 11, kind: input, shape index: {}]
  %s12 = inlined_call_operand.hbm [shape: bf16[128,256], index: 12, kind: input, shape index: {}]
  %s13 = inlined_call_operand.vmem [shape: f32[1,256], index: 13, kind: input, shape index: {}]
  %s14 = inlined_call_operand.hbm [shape: bf16[256,128], index: 14, kind: input, shape index: {}]
  %s15 = inlined_call_operand.vmem [shape: f32[1,128], index: 15, kind: input, shape index: {}]
  %s16 = inlined_call_operand.vmem [shape: f32[1,128], index: 16, kind: input, shape index: {}]
  %s17 = inlined_call_operand.vmem [shape: f32[1,128], index: 17, kind: input, shape index: {}]
  %s18 = inlined_call_operand.hbm [shape: f32[2,16,128], index: 18, kind: output, shape index: {}]
  %s19 = sld [smem:[#allocation0]]
  $region133: #{tpu_custom_call.1} parent=0
    _
  %s21 = ssub.s32 1, %s19
  %s22 = scalar_select 0, %s21, %s19
  $region1: #{tpu_custom_call.1} parent=0
    #allocation2 [shape = 'u8[16384]{0}', space=vmem, size = 0x4000, scoped, tag = 'input window, operand 0']
    #allocation3 [shape = 's32[2]{0}', space=sflag, size = 0x8, scoped, tag = 'scoped memory for tpu_custom_call.1']
    #allocation4 [shape = 's32[2]{0}', space=sflag, size = 0x8, scoped, tag = 'scoped memory for tpu_custom_call.1']
    #allocation5 [shape = 'u8[32768]{0}', space=vmem, size = 0x8000, scoped, tag = 'input window, operand 2, single buffered']
    #allocation6 [shape = 's32[1]{0}', space=sflag, size = 0x4, scoped, tag = 'scoped memory for tpu_custom_call.1']
    #allocation7 [shape = 'u8[32768]{0}', space=vmem, size = 0x8000, scoped, tag = 'input window, operand 4, single buffered']
    #allocation8 [shape = 'u8[32768]{0}', space=vmem, size = 0x8000, scoped, tag = 'input window, operand 6, single buffered']
    #allocation9 [shape = 's32[1]{0}', space=sflag, size = 0x4, scoped, tag = 'scoped memory for tpu_custom_call.1']
    #allocation10 [shape = 'u8[32768]{0}', space=vmem, size = 0x8000, scoped, tag = 'input window, operand 8, single buffered']
    #allocation11 [shape = 'u8[65536]{0}', space=vmem, size = 0x10000, scoped, tag = 'input window, operand 12, single buffered']
    #allocation12 [shape = 's32[1]{0}', space=sflag, size = 0x4, scoped, tag = 'scoped memory for tpu_custom_call.1']
    #allocation13 [shape = 'u8[65536]{0}', space=vmem, size = 0x10000, scoped, tag = 'input window, operand 14, single buffered']
    #allocation14 [shape = 'u8[16384]{0}', space=vmem, size = 0x4000, scoped, tag = 'output window, operand 0']
    %23 = vsyncpa [#allocation3], 0
    %s24 = scalar_lea.sflag [#allocation3], 1
    %25 = vsyncpa %s24, 0
    %26 = vsyncpa [#allocation6], 0
    %27 = vsyncpa [#allocation9], 0
    %28 = vsyncpa [#allocation12], 0
    %29 = vsyncpa [#allocation4], 0
    %s30 = scalar_lea.sflag [#allocation4], 1
    %31 = vsyncpa %s30, 0
    loop: start=0, step=1, limit=4
    $region2: #{tpu_custom_call.1} parent=1 // loop_pre_header
      _
    $region3: #{tpu_custom_call.1} parent=1 // loop_header
      %s33 = sphi 0, %s37
      %p34 = scmp.ge.s32.totalorder %s33, 4
      %s43 = sphi 0, %s45
      %s46 = sphi 0, %s43
      %s47 = sphi 0, %s46
      %s63 = sphi 0, %s47
      %s69 = sphi 0, %s71
      %s72 = sphi 0, %s69
      %s73 = sphi 0, %s72
      %s89 = sphi 0, %s73
      %s93 = sphi 0, %s93
      %s95 = sphi 0, %s93
      %s96 = sphi 0, %s95
      %s110 = sphi 0, %s96
      %s114 = sphi 0, %s114
      %s116 = sphi 0, %s114
      %s117 = sphi 0, %s116
      %s131 = sphi 0, %s117
      %s135 = sphi 0, %s135
      %s137 = sphi 0, %s135
      %s138 = sphi 0, %s137
      %s152 = sphi 0, %s138
      %s156 = sphi 0, %s156
      %s158 = sphi 0, %s156
      %s159 = sphi 0, %s158
      %s173 = sphi 0, %s159
      %s177 = sphi 0, %s177
      %s179 = sphi 0, %s177
      %s180 = sphi 0, %s179
      %s194 = sphi 0, %s180
      %s198 = sphi 0, %s198
      %s200 = sphi 0, %s198
      %s201 = sphi 0, %s200
      %s215 = sphi 0, %s201
      %s219 = sphi 0, %s219
      %s221 = sphi 0, %s219
      %s222 = sphi 0, %s221
      %s236 = sphi 0, %s222
      %s240 = sphi 0, %s240
      %s242 = sphi 0, %s240
      %s243 = sphi 0, %s242
      %s257 = sphi 0, %s243
      %s261 = sphi 0, %s261
      %s263 = sphi 0, %s261
      %s264 = sphi 0, %s263
      %s278 = sphi 0, %s264
      %s282 = sphi 0, %s282
      %s284 = sphi 0, %s282
      %s285 = sphi 0, %s284
      %s299 = sphi 0, %s285
      %s303 = sphi 0, %s303
      %s305 = sphi 0, %s303
      %s306 = sphi 0, %s305
      %s320 = sphi 0, %s306
      %s324 = sphi 0, %s324
      %s326 = sphi 0, %s324
      %s327 = sphi 0, %s326
      %s341 = sphi 0, %s327
      %s345 = sphi 0, %s345
      %s347 = sphi 0, %s345
      %s348 = sphi 0, %s347
      %s362 = sphi 0, %s348
      %s366 = sphi 0, %s366
      %s368 = sphi 0, %s366
      %s369 = sphi 0, %s368
      %s383 = sphi 0, %s369
      %s387 = sphi 0, %s387
      %s389 = sphi 0, %s387
      %s390 = sphi 0, %s389
      %s404 = sphi 0, %s390
      %s408 = sphi 0, %s408
      %s410 = sphi 0, %s408
      %s411 = sphi 0, %s410
      %s425 = sphi 0, %s411
      %s431 = sphi 0, %s433
      %s434 = sphi 0, %s431
      %s435 = sphi 0, %s434
      %s451 = sphi 0, %s435
    $region4: #{tpu_custom_call.1} parent=1 // loop_header_branch
      %36 = sbr.rel (%p34) target = $region8
    $region5: #{tpu_custom_call.1} parent=1 // loop_body
      %s38 = ssub.s32 %s33, 1
      %s39 = ssub.s32 %s33, 2
      %s40 = sadd.s32 %s33, 1
      %s41 = ssub.s32 %s33, %s40
      %p42 = scmp.eq.s32.totalorder %s41, 0
      %s44 = sadd.s32 %s43, 1
      %s45 = scalar_select %p42, %s43, %s44
      %p48 = pneg %p42
      %p49 = scmp.eq.s32.totalorder %s33, 1
      %p50 = por %p48, %p49
      %p51 = scmp.ne.s32.totalorder %s43, %s46
      %p52 = scmp.eq.s32.totalorder %s33, 0
      %p53 = por %p51, %p52
      %p54 = scmp.ne.s32.totalorder %s43, %s46
      %p55 = scmp.eq.s32.totalorder %s38, 1
      %p56 = por %p54, %p55
      %p57 = scmp.ne.s32.totalorder %s46, %s47
      %p58 = scmp.eq.s32.totalorder %s38, 0
      %p59 = por %p57, %p58
      %p60 = scmp.ne.s32.totalorder %s46, %s47
      %p61 = scmp.eq.s32.totalorder %s39, 1
      %p62 = por %p60, %p61
      %p64 = scmp.ne.s32.totalorder %s47, %s63
      %p65 = scmp.eq.s32.totalorder %s39, 0
      %p66 = por %p64, %p65
      %s67 = ssub.s32 %s33, %s40
      %p68 = scmp.eq.s32.totalorder %s67, 0
      %s70 = sadd.s32 %s69, 1
      %s71 = scalar_select %p68, %s69, %s70
      %p74 = pneg %p68
      %p75 = scmp.eq.s32.totalorder %s33, 1
      %p76 = por %p74, %p75
      %p77 = scmp.ne.s32.totalorder %s69, %s72
      %p78 = scmp.eq.s32.totalorder %s33, 0
      %p79 = por %p77, %p78
      %p80 = scmp.ne.s32.totalorder %s69, %s72
      %p81 = scmp.eq.s32.totalorder %s38, 1
      %p82 = por %p80, %p81
      %p83 = scmp.ne.s32.totalorder %s72, %s73
      %p84 = scmp.eq.s32.totalorder %s38, 0
      %p85 = por %p83, %p84
      %p86 = scmp.ne.s32.totalorder %s72, %s73
      %p87 = scmp.eq.s32.totalorder %s39, 1
      %p88 = por %p86, %p87
      %p90 = scmp.ne.s32.totalorder %s73, %s89
      %p91 = scmp.eq.s32.totalorder %s39, 0
      %p92 = por %p90, %p91
      %s94 = sadd.s32 %s93, 1
      %p97 = scmp.eq.s32.totalorder %s33, 1
      %p98 = scmp.ne.s32.totalorder %s93, %s95
      %p99 = scmp.eq.s32.totalorder %s33, 0
      %p100 = por %p98, %p99
      %p101 = scmp.ne.s32.totalorder %s93, %s95
      %p102 = scmp.eq.s32.totalorder %s38, 1
      %p103 = por %p101, %p102
      %p104 = scmp.ne.s32.totalorder %s95, %s96
      %p105 = scmp.eq.s32.totalorder %s38, 0
      %p106 = por %p104, %p105
      %p107 = scmp.ne.s32.totalorder %s95, %s96
      %p108 = scmp.eq.s32.totalorder %s39, 1
      %p109 = por %p107, %p108
      %p111 = scmp.ne.s32.totalorder %s96, %s110
      %p112 = scmp.eq.s32.totalorder %s39, 0
      %p113 = por %p111, %p112
      %s115 = sadd.s32 %s114, 1
      %p118 = scmp.eq.s32.totalorder %s33, 1
      %p119 = scmp.ne.s32.totalorder %s114, %s116
      %p120 = scmp.eq.s32.totalorder %s33, 0
      %p121 = por %p119, %p120
      %p122 = scmp.ne.s32.totalorder %s114, %s116
      %p123 = scmp.eq.s32.totalorder %s38, 1
      %p124 = por %p122, %p123
      %p125 = scmp.ne.s32.totalorder %s116, %s117
      %p126 = scmp.eq.s32.totalorder %s38, 0
      %p127 = por %p125, %p126
      %p128 = scmp.ne.s32.totalorder %s116, %s117
      %p129 = scmp.eq.s32.totalorder %s39, 1
      %p130 = por %p128, %p129
      %p132 = scmp.ne.s32.totalorder %s117, %s131
      %p133 = scmp.eq.s32.totalorder %s39, 0
      %p134 = por %p132, %p133
      %s136 = sadd.s32 %s135, 1
      %p139 = scmp.eq.s32.totalorder %s33, 1
      %p140 = scmp.ne.s32.totalorder %s135, %s137
      %p141 = scmp.eq.s32.totalorder %s33, 0
      %p142 = por %p140, %p141
      %p143 = scmp.ne.s32.totalorder %s135, %s137
      %p144 = scmp.eq.s32.totalorder %s38, 1
      %p145 = por %p143, %p144
      %p146 = scmp.ne.s32.totalorder %s137, %s138
      %p147 = scmp.eq.s32.totalorder %s38, 0
      %p148 = por %p146, %p147
      %p149 = scmp.ne.s32.totalorder %s137, %s138
      %p150 = scmp.eq.s32.totalorder %s39, 1
      %p151 = por %p149, %p150
      %p153 = scmp.ne.s32.totalorder %s138, %s152
      %p154 = scmp.eq.s32.totalorder %s39, 0
      %p155 = por %p153, %p154
      %s157 = sadd.s32 %s156, 1
      %p160 = scmp.eq.s32.totalorder %s33, 1
      %p161 = scmp.ne.s32.totalorder %s156, %s158
      %p162 = scmp.eq.s32.totalorder %s33, 0
      %p163 = por %p161, %p162
      %p164 = scmp.ne.s32.totalorder %s156, %s158
      %p165 = scmp.eq.s32.totalorder %s38, 1
      %p166 = por %p164, %p165
      %p167 = scmp.ne.s32.totalorder %s158, %s159
      %p168 = scmp.eq.s32.totalorder %s38, 0
      %p169 = por %p167, %p168
      %p170 = scmp.ne.s32.totalorder %s158, %s159
      %p171 = scmp.eq.s32.totalorder %s39, 1
      %p172 = por %p170, %p171
      %p174 = scmp.ne.s32.totalorder %s159, %s173
      %p175 = scmp.eq.s32.totalorder %s39, 0
      %p176 = por %p174, %p175
      %s178 = sadd.s32 %s177, 1
      %p181 = scmp.eq.s32.totalorder %s33, 1
      %p182 = scmp.ne.s32.totalorder %s177, %s179
      %p183 = scmp.eq.s32.totalorder %s33, 0
      %p184 = por %p182, %p183
      %p185 = scmp.ne.s32.totalorder %s177, %s179
      %p186 = scmp.eq.s32.totalorder %s38, 1
      %p187 = por %p185, %p186
      %p188 = scmp.ne.s32.totalorder %s179, %s180
      %p189 = scmp.eq.s32.totalorder %s38, 0
      %p190 = por %p188, %p189
      %p191 = scmp.ne.s32.totalorder %s179, %s180
      %p192 = scmp.eq.s32.totalorder %s39, 1
      %p193 = por %p191, %p192
      %p195 = scmp.ne.s32.totalorder %s180, %s194
      %p196 = scmp.eq.s32.totalorder %s39, 0
      %p197 = por %p195, %p196
      %s199 = sadd.s32 %s198, 1
      %p202 = scmp.eq.s32.totalorder %s33, 1
      %p203 = scmp.ne.s32.totalorder %s198, %s200
      %p204 = scmp.eq.s32.totalorder %s33, 0
      %p205 = por %p203, %p204
      %p206 = scmp.ne.s32.totalorder %s198, %s200
      %p207 = scmp.eq.s32.totalorder %s38, 1
      %p208 = por %p206, %p207
      %p209 = scmp.ne.s32.totalorder %s200, %s201
      %p210 = scmp.eq.s32.totalorder %s38, 0
      %p211 = por %p209, %p210
      %p212 = scmp.ne.s32.totalorder %s200, %s201
      %p213 = scmp.eq.s32.totalorder %s39, 1
      %p214 = por %p212, %p213
      %p216 = scmp.ne.s32.totalorder %s201, %s215
      %p217 = scmp.eq.s32.totalorder %s39, 0
      %p218 = por %p216, %p217
      %s220 = sadd.s32 %s219, 1
      %p223 = scmp.eq.s32.totalorder %s33, 1
      %p224 = scmp.ne.s32.totalorder %s219, %s221
      %p225 = scmp.eq.s32.totalorder %s33, 0
      %p226 = por %p224, %p225
      %p227 = scmp.ne.s32.totalorder %s219, %s221
      %p228 = scmp.eq.s32.totalorder %s38, 1
      %p229 = por %p227, %p228
      %p230 = scmp.ne.s32.totalorder %s221, %s222
      %p231 = scmp.eq.s32.totalorder %s38, 0
      %p232 = por %p230, %p231
      %p233 = scmp.ne.s32.totalorder %s221, %s222
      %p234 = scmp.eq.s32.totalorder %s39, 1
      %p235 = por %p233, %p234
      %p237 = scmp.ne.s32.totalorder %s222, %s236
      %p238 = scmp.eq.s32.totalorder %s39, 0
      %p239 = por %p237, %p238
      %s241 = sadd.s32 %s240, 1
      %p244 = scmp.eq.s32.totalorder %s33, 1
      %p245 = scmp.ne.s32.totalorder %s240, %s242
      %p246 = scmp.eq.s32.totalorder %s33, 0
      %p247 = por %p245, %p246
      %p248 = scmp.ne.s32.totalorder %s240, %s242
      %p249 = scmp.eq.s32.totalorder %s38, 1
      %p250 = por %p248, %p249
      %p251 = scmp.ne.s32.totalorder %s242, %s243
      %p252 = scmp.eq.s32.totalorder %s38, 0
      %p253 = por %p251, %p252
      %p254 = scmp.ne.s32.totalorder %s242, %s243
      %p255 = scmp.eq.s32.totalorder %s39, 1
      %p256 = por %p254, %p255
      %p258 = scmp.ne.s32.totalorder %s243, %s257
      %p259 = scmp.eq.s32.totalorder %s39, 0
      %p260 = por %p258, %p259
      %s262 = sadd.s32 %s261, 1
      %p265 = scmp.eq.s32.totalorder %s33, 1
      %p266 = scmp.ne.s32.totalorder %s261, %s263
      %p267 = scmp.eq.s32.totalorder %s33, 0
      %p268 = por %p266, %p267
      %p269 = scmp.ne.s32.totalorder %s261, %s263
      %p270 = scmp.eq.s32.totalorder %s38, 1
      %p271 = por %p269, %p270
      %p272 = scmp.ne.s32.totalorder %s263, %s264
      %p273 = scmp.eq.s32.totalorder %s38, 0
      %p274 = por %p272, %p273
      %p275 = scmp.ne.s32.totalorder %s263, %s264
      %p276 = scmp.eq.s32.totalorder %s39, 1
      %p277 = por %p275, %p276
      %p279 = scmp.ne.s32.totalorder %s264, %s278
      %p280 = scmp.eq.s32.totalorder %s39, 0
      %p281 = por %p279, %p280
      %s283 = sadd.s32 %s282, 1
      %p286 = scmp.eq.s32.totalorder %s33, 1
      %p287 = scmp.ne.s32.totalorder %s282, %s284
      %p288 = scmp.eq.s32.totalorder %s33, 0
      %p289 = por %p287, %p288
      %p290 = scmp.ne.s32.totalorder %s282, %s284
      %p291 = scmp.eq.s32.totalorder %s38, 1
      %p292 = por %p290, %p291
      %p293 = scmp.ne.s32.totalorder %s284, %s285
      %p294 = scmp.eq.s32.totalorder %s38, 0
      %p295 = por %p293, %p294
      %p296 = scmp.ne.s32.totalorder %s284, %s285
      %p297 = scmp.eq.s32.totalorder %s39, 1
      %p298 = por %p296, %p297
      %p300 = scmp.ne.s32.totalorder %s285, %s299
      %p301 = scmp.eq.s32.totalorder %s39, 0
      %p302 = por %p300, %p301
      %s304 = sadd.s32 %s303, 1
      %p307 = scmp.eq.s32.totalorder %s33, 1
      %p308 = scmp.ne.s32.totalorder %s303, %s305
      %p309 = scmp.eq.s32.totalorder %s33, 0
      %p310 = por %p308, %p309
      %p311 = scmp.ne.s32.totalorder %s303, %s305
      %p312 = scmp.eq.s32.totalorder %s38, 1
      %p313 = por %p311, %p312
      %p314 = scmp.ne.s32.totalorder %s305, %s306
      %p315 = scmp.eq.s32.totalorder %s38, 0
      %p316 = por %p314, %p315
      %p317 = scmp.ne.s32.totalorder %s305, %s306
      %p318 = scmp.eq.s32.totalorder %s39, 1
      %p319 = por %p317, %p318
      %p321 = scmp.ne.s32.totalorder %s306, %s320
      %p322 = scmp.eq.s32.totalorder %s39, 0
      %p323 = por %p321, %p322
      %s325 = sadd.s32 %s324, 1
      %p328 = scmp.eq.s32.totalorder %s33, 1
      %p329 = scmp.ne.s32.totalorder %s324, %s326
      %p330 = scmp.eq.s32.totalorder %s33, 0
      %p331 = por %p329, %p330
      %p332 = scmp.ne.s32.totalorder %s324, %s326
      %p333 = scmp.eq.s32.totalorder %s38, 1
      %p334 = por %p332, %p333
      %p335 = scmp.ne.s32.totalorder %s326, %s327
      %p336 = scmp.eq.s32.totalorder %s38, 0
      %p337 = por %p335, %p336
      %p338 = scmp.ne.s32.totalorder %s326, %s327
      %p339 = scmp.eq.s32.totalorder %s39, 1
      %p340 = por %p338, %p339
      %p342 = scmp.ne.s32.totalorder %s327, %s341
      %p343 = scmp.eq.s32.totalorder %s39, 0
      %p344 = por %p342, %p343
      %s346 = sadd.s32 %s345, 1
      %p349 = scmp.eq.s32.totalorder %s33, 1
      %p350 = scmp.ne.s32.totalorder %s345, %s347
      %p351 = scmp.eq.s32.totalorder %s33, 0
      %p352 = por %p350, %p351
      %p353 = scmp.ne.s32.totalorder %s345, %s347
      %p354 = scmp.eq.s32.totalorder %s38, 1
      %p355 = por %p353, %p354
      %p356 = scmp.ne.s32.totalorder %s347, %s348
      %p357 = scmp.eq.s32.totalorder %s38, 0
      %p358 = por %p356, %p357
      %p359 = scmp.ne.s32.totalorder %s347, %s348
      %p360 = scmp.eq.s32.totalorder %s39, 1
      %p361 = por %p359, %p360
      %p363 = scmp.ne.s32.totalorder %s348, %s362
      %p364 = scmp.eq.s32.totalorder %s39, 0
      %p365 = por %p363, %p364
      %s367 = sadd.s32 %s366, 1
      %p370 = scmp.eq.s32.totalorder %s33, 1
      %p371 = scmp.ne.s32.totalorder %s366, %s368
      %p372 = scmp.eq.s32.totalorder %s33, 0
      %p373 = por %p371, %p372
      %p374 = scmp.ne.s32.totalorder %s366, %s368
      %p375 = scmp.eq.s32.totalorder %s38, 1
      %p376 = por %p374, %p375
      %p377 = scmp.ne.s32.totalorder %s368, %s369
      %p378 = scmp.eq.s32.totalorder %s38, 0
      %p379 = por %p377, %p378
      %p380 = scmp.ne.s32.totalorder %s368, %s369
      %p381 = scmp.eq.s32.totalorder %s39, 1
      %p382 = por %p380, %p381
      %p384 = scmp.ne.s32.totalorder %s369, %s383
      %p385 = scmp.eq.s32.totalorder %s39, 0
      %p386 = por %p384, %p385
      %s388 = sadd.s32 %s387, 1
      %p391 = scmp.eq.s32.totalorder %s33, 1
      %p392 = scmp.ne.s32.totalorder %s387, %s389
      %p393 = scmp.eq.s32.totalorder %s33, 0
      %p394 = por %p392, %p393
      %p395 = scmp.ne.s32.totalorder %s387, %s389
      %p396 = scmp.eq.s32.totalorder %s38, 1
      %p397 = por %p395, %p396
      %p398 = scmp.ne.s32.totalorder %s389, %s390
      %p399 = scmp.eq.s32.totalorder %s38, 0
      %p400 = por %p398, %p399
      %p401 = scmp.ne.s32.totalorder %s389, %s390
      %p402 = scmp.eq.s32.totalorder %s39, 1
      %p403 = por %p401, %p402
      %p405 = scmp.ne.s32.totalorder %s390, %s404
      %p406 = scmp.eq.s32.totalorder %s39, 0
      %p407 = por %p405, %p406
      %s409 = sadd.s32 %s408, 1
      %p412 = scmp.eq.s32.totalorder %s33, 1
      %p413 = scmp.ne.s32.totalorder %s408, %s410
      %p414 = scmp.eq.s32.totalorder %s33, 0
      %p415 = por %p413, %p414
      %p416 = scmp.ne.s32.totalorder %s408, %s410
      %p417 = scmp.eq.s32.totalorder %s38, 1
      %p418 = por %p416, %p417
      %p419 = scmp.ne.s32.totalorder %s410, %s411
      %p420 = scmp.eq.s32.totalorder %s38, 0
      %p421 = por %p419, %p420
      %p422 = scmp.ne.s32.totalorder %s410, %s411
      %p423 = scmp.eq.s32.totalorder %s39, 1
      %p424 = por %p422, %p423
      %p426 = scmp.ne.s32.totalorder %s411, %s425
      %p427 = scmp.eq.s32.totalorder %s39, 0
      %p428 = por %p426, %p427
      %s429 = ssub.s32 %s33, %s40
      %p430 = scmp.eq.s32.totalorder %s429, 0
      %s432 = sadd.s32 %s431, 1
      %s433 = scalar_select %p430, %s431, %s432
      %p436 = pneg %p430
      %p437 = scmp.eq.s32.totalorder %s33, 1
      %p438 = por %p436, %p437
      %p439 = scmp.ne.s32.totalorder %s431, %s434
      %p440 = scmp.eq.s32.totalorder %s33, 0
      %p441 = por %p439, %p440
      %p442 = scmp.ne.s32.totalorder %s431, %s434
      %p443 = scmp.eq.s32.totalorder %s38, 1
      %p444 = por %p442, %p443
      %p445 = scmp.ne.s32.totalorder %s434, %s435
      %p446 = scmp.eq.s32.totalorder %s38, 0
      %p447 = por %p445, %p446
      %p448 = scmp.ne.s32.totalorder %s434, %s435
      %p449 = scmp.eq.s32.totalorder %s39, 1
      %p450 = por %p448, %p449
      %p452 = scmp.ne.s32.totalorder %s435, %s451
      %p453 = scmp.eq.s32.totalorder %s39, 0
      %p454 = por %p452, %p453
      %p455 = scmp.le.s32.totalorder 1, %s33
      %p456 = scmp.lt.s32.totalorder %s33, 3
      %p457 = pnand %p455, %p456
      %p458 = pneg %p457
      // Predicated region
      $region9: #{tpu_custom_call.1} parent=5 // pred_check
        _
      $region10: #{tpu_custom_call.1} parent=5 // pred_check_branch
        %460 = sbr.rel (%p457) target = $region12
      $region11: #{tpu_custom_call.1} parent=5 // pred_region
        %s461 = ssub.s32 %s33, 1
        // Predicated region
        $region13: #{tpu_custom_call.1} parent=11 // pred_check
          %p462 = pneg %p106
        $region14: #{tpu_custom_call.1} parent=11 // pred_check_branch
          %464 = sbr.rel (%p462) target = $region16
        $region15: #{tpu_custom_call.1} parent=11 // pred_region
          %s466 = ssub.s32 1024, 1024
          %467 = vsyncadd [#allocation6], %s466
          %s468 = sshll.u32 [#allocation5], 4
          %s469 = int_to_ptr.vmem [resolvable:$true] %s468
          %474 = dma.hbm_to_vmem [thread:$0]  %s2, 1024, %s469, [#allocation6], 64, 64, 4
        $region16: #{tpu_custom_call.1} parent=11 // pred_fallthru
          _
        // Predicated region
        $region17: #{tpu_custom_call.1} parent=11 // pred_check
          %p475 = pneg %p127
        $region18: #{tpu_custom_call.1} parent=11 // pred_check_branch
          %477 = sbr.rel (%p475) target = $region20
        $region19: #{tpu_custom_call.1} parent=11 // pred_region
          _
        $region20: #{tpu_custom_call.1} parent=11 // pred_fallthru
          _
        // Predicated region
        $region21: #{tpu_custom_call.1} parent=11 // pred_check
          %p478 = pneg %p148
        $region22: #{tpu_custom_call.1} parent=11 // pred_check_branch
          %480 = sbr.rel (%p478) target = $region24
        $region23: #{tpu_custom_call.1} parent=11 // pred_region
          %s482 = ssub.s32 1024, 1024
          %483 = vsyncadd [#allocation6], %s482
          %s484 = sshll.u32 [#allocation7], 4
          %s485 = int_to_ptr.vmem [resolvable:$true] %s484
          %490 = dma.hbm_to_vmem [thread:$0]  %s4, 1024, %s485, [#allocation6], 64, 64, 4
        $region24: #{tpu_custom_call.1} parent=11 // pred_fallthru
          _
        // Predicated region
        $region25: #{tpu_custom_call.1} parent=11 // pred_check
          %p491 = pneg %p169
        $region26: #{tpu_custom_call.1} parent=11 // pred_check_branch
          %493 = sbr.rel (%p491) target = $region28
        $region27: #{tpu_custom_call.1} parent=11 // pred_region
          _
        $region28: #{tpu_custom_call.1} parent=11 // pred_fallthru
          _
        // Predicated region
        $region29: #{tpu_custom_call.1} parent=11 // pred_check
          %p494 = pneg %p190
        $region30: #{tpu_custom_call.1} parent=11 // pred_check_branch
          %496 = sbr.rel (%p494) target = $region32
        $region31: #{tpu_custom_call.1} parent=11 // pred_region
          %s498 = ssub.s32 1024, 1024
          %499 = vsyncadd [#allocation9], %s498
          %s500 = sshll.u32 [#allocation8], 4
          %s501 = int_to_ptr.vmem [resolvable:$true] %s500
          %506 = dma.hbm_to_vmem [thread:$0]  %s6, 1024, %s501, [#allocation9], 64, 64, 4
        $region32: #{tpu_custom_call.1} parent=11 // pred_fallthru
          _
        // Predicated region
        $region33: #{tpu_custom_call.1} parent=11 // pred_check
          %p507 = pneg %p211
        $region34: #{tpu_custom_call.1} parent=11 // pred_check_branch
          %509 = sbr.rel (%p507) target = $region36
        $region35: #{tpu_custom_call.1} parent=11 // pred_region
          _
        $region36: #{tpu_custom_call.1} parent=11 // pred_fallthru
          _
        // Predicated region
        $region37: #{tpu_custom_call.1} parent=11 // pred_check
          %p510 = pneg %p232
        $region38: #{tpu_custom_call.1} parent=11 // pred_check_branch
          %512 = sbr.rel (%p510) target = $region40
        $region39: #{tpu_custom_call.1} parent=11 // pred_region
          %s514 = ssub.s32 1024, 1024
          %515 = vsyncadd [#allocation9], %s514
          %s516 = sshll.u32 [#allocation10], 4
          %s517 = int_to_ptr.vmem [resolvable:$true] %s516
          %522 = dma.hbm_to_vmem [thread:$0]  %s8, 1024, %s517, [#allocation9], 64, 64, 4
        $region40: #{tpu_custom_call.1} parent=11 // pred_fallthru
          _
        // Predicated region
        $region41: #{tpu_custom_call.1} parent=11 // pred_check
          %p523 = pneg %p253
        $region42: #{tpu_custom_call.1} parent=11 // pred_check_branch
          %525 = sbr.rel (%p523) target = $region44
        $region43: #{tpu_custom_call.1} parent=11 // pred_region
          _
        $region44: #{tpu_custom_call.1} parent=11 // pred_fallthru
          _
        // Predicated region
        $region45: #{tpu_custom_call.1} parent=11 // pred_check
          %p526 = pneg %p274
        $region46: #{tpu_custom_call.1} parent=11 // pred_check_branch
          %528 = sbr.rel (%p526) target = $region48
        $region47: #{tpu_custom_call.1} parent=11 // pred_region
          _
        $region48: #{tpu_custom_call.1} parent=11 // pred_fallthru
          _
        // Predicated region
        $region49: #{tpu_custom_call.1} parent=11 // pred_check
          %p529 = pneg %p295
        $region50: #{tpu_custom_call.1} parent=11 // pred_check_branch
          %531 = sbr.rel (%p529) target = $region52
        $region51: #{tpu_custom_call.1} parent=11 // pred_region
          _
        $region52: #{tpu_custom_call.1} parent=11 // pred_fallthru
          _
        // Predicated region
        $region53: #{tpu_custom_call.1} parent=11 // pred_check
          %p532 = pneg %p316
        $region54: #{tpu_custom_call.1} parent=11 // pred_check_branch
          %534 = sbr.rel (%p532) target = $region56
        $region55: #{tpu_custom_call.1} parent=11 // pred_region
          %s536 = ssub.s32 2048, 2048
          %537 = vsyncadd [#allocation12], %s536
          %s538 = sshll.u32 [#allocation11], 4
          %s539 = int_to_ptr.vmem [resolvable:$true] %s538
          %544 = dma.hbm_to_vmem [thread:$0]  %s12, 2048, %s539, [#allocation12], 128, 128, 8
        $region56: #{tpu_custom_call.1} parent=11 // pred_fallthru
          _
        // Predicated region
        $region57: #{tpu_custom_call.1} parent=11 // pred_check
          %p545 = pneg %p337
        $region58: #{tpu_custom_call.1} parent=11 // pred_check_branch
          %547 = sbr.rel (%p545) target = $region60
        $region59: #{tpu_custom_call.1} parent=11 // pred_region
          _
        $region60: #{tpu_custom_call.1} parent=11 // pred_fallthru
          _
        // Predicated region
        $region61: #{tpu_custom_call.1} parent=11 // pred_check
          %p548 = pneg %p358
        $region62: #{tpu_custom_call.1} parent=11 // pred_check_branch
          %550 = sbr.rel (%p548) target = $region64
        $region63: #{tpu_custom_call.1} parent=11 // pred_region
          %s552 = ssub.s32 2048, 2048
          %553 = vsyncadd [#allocation12], %s552
          %s554 = sshll.u32 [#allocation13], 4
          %s555 = int_to_ptr.vmem [resolvable:$true] %s554
          %560 = dma.hbm_to_vmem [thread:$0]  %s14, 2048, %s555, [#allocation12], 64, 64, 4
        $region64: #{tpu_custom_call.1} parent=11 // pred_fallthru
          _
        // Predicated region
        $region65: #{tpu_custom_call.1} parent=11 // pred_check
          %p561 = pneg %p379
        $region66: #{tpu_custom_call.1} parent=11 // pred_check_branch
          %563 = sbr.rel (%p561) target = $region68
        $region67: #{tpu_custom_call.1} parent=11 // pred_region
          _
        $region68: #{tpu_custom_call.1} parent=11 // pred_fallthru
          _
        // Predicated region
        $region69: #{tpu_custom_call.1} parent=11 // pred_check
          %p564 = pneg %p400
        $region70: #{tpu_custom_call.1} parent=11 // pred_check_branch
          %566 = sbr.rel (%p564) target = $region72
        $region71: #{tpu_custom_call.1} parent=11 // pred_region
          _
        $region72: #{tpu_custom_call.1} parent=11 // pred_fallthru
          _
        // Predicated region
        $region73: #{tpu_custom_call.1} parent=11 // pred_check
          %p567 = pneg %p421
        $region74: #{tpu_custom_call.1} parent=11 // pred_check_branch
          %569 = sbr.rel (%p567) target = $region76
        $region75: #{tpu_custom_call.1} parent=11 // pred_region
          _
        $region76: #{tpu_custom_call.1} parent=11 // pred_fallthru
          _
      $region12: #{tpu_custom_call.1} parent=5 // pred_fallthru
        _
      %p570 = scmp.lt.s32.totalorder %s33, 2
      // Predicated region
      $region77: #{tpu_custom_call.1} parent=5 // pred_check
        %p571 = pneg %p570
      $region78: #{tpu_custom_call.1} parent=5 // pred_check_branch
        %573 = sbr.rel (%p571) target = $region80
      $region79: #{tpu_custom_call.1} parent=5 // pred_region
        // Predicated region
        $region81: #{tpu_custom_call.1} parent=79 // pred_check
          %p574 = pneg %p53
        $region82: #{tpu_custom_call.1} parent=79 // pred_check_branch
          %576 = sbr.rel (%p574) target = $region84
        $region83: #{tpu_custom_call.1} parent=79 // pred_region
          %s577 = sand.u32 %s43, 1
          %s578 = scalar_lea.sflag [#allocation3], %s577
          %s579 = sand.u32 %s43, 1
          %s580 = smul.addr %s579, 16
          %s581 = scalar_lea.vmem [#allocation2], %s580
          %s583 = ssub.s32 256, 256
          %584 = vsyncadd %s578, %s583
          %s585 = smul.addr %s33, 2
          %s586 = smul.addr %s585, 128
          %s587 = scalar_lea.hbm %s0, %s586
          %s588 = sshll.u32 %s581, 4
          %s589 = int_to_ptr.vmem [resolvable:$true] %s588
          %594 = dma.hbm_to_vmem [thread:$0]  %s587, 256, %s589, %s578, 128, 128, 8
        $region84: #{tpu_custom_call.1} parent=79 // pred_fallthru
          _
        // Predicated region
        $region85: #{tpu_custom_call.1} parent=79 // pred_check
          %p595 = pneg %p79
        $region86: #{tpu_custom_call.1} parent=79 // pred_check_branch
          %597 = sbr.rel (%p595) target = $region88
        $region87: #{tpu_custom_call.1} parent=79 // pred_region
          %p598 = scmp.lt.s32.totalorder %s33, 1
          %s599 = scalar_select %p598, %s33, 1
          %s600 = scalar_lea.vmem %s1, %s599
        $region88: #{tpu_custom_call.1} parent=79 // pred_fallthru
          _
      $region80: #{tpu_custom_call.1} parent=5 // pred_fallthru
        _
      %p601 = scmp.le.s32.totalorder 1, %s33
      %p602 = scmp.lt.s32.totalorder %s33, 3
      %p603 = pnand %p601, %p602
      %p604 = pneg %p603
      // Predicated region
      $region89: #{tpu_custom_call.1} parent=5 // pred_check
        _
      $region90: #{tpu_custom_call.1} parent=5 // pred_check_branch
        %606 = sbr.rel (%p603) target = $region92
      $region91: #{tpu_custom_call.1} parent=5 // pred_region
        %s607 = ssub.s32 %s33, 1
        %s608 = sand.u32 %s46, 1
        %s609 = scalar_lea.sflag [#allocation3], %s608
        %s610 = sand.u32 %s46, 1
        %s611 = smul.addr %s610, 16
        %s612 = scalar_lea.vmem [#allocation2], %s611
        // Predicated region
        $region93: #{tpu_custom_call.1} parent=91 // pred_check
          %p613 = pneg %p59
        $region94: #{tpu_custom_call.1} parent=91 // pred_check_branch
          %615 = sbr.rel (%p613) target = $region96
        $region95: #{tpu_custom_call.1} parent=91 // pred_region
          %616 = dma.done %s609, 256
        $region96: #{tpu_custom_call.1} parent=91 // pred_fallthru
          _
        // Predicated region
        $region97: #{tpu_custom_call.1} parent=91 // pred_check
          %p617 = pneg %p106
        $region98: #{tpu_custom_call.1} parent=91 // pred_check_branch
          %619 = sbr.rel (%p617) target = $region100
        $region99: #{tpu_custom_call.1} parent=91 // pred_region
          %620 = dma.done [#allocation6], 1024
        $region100: #{tpu_custom_call.1} parent=91 // pred_fallthru
          _
        // Predicated region
        $region101: #{tpu_custom_call.1} parent=91 // pred_check
          %p621 = pneg %p148
        $region102: #{tpu_custom_call.1} parent=91 // pred_check_branch
          %623 = sbr.rel (%p621) target = $region104
        $region103: #{tpu_custom_call.1} parent=91 // pred_region
          %624 = dma.done [#allocation6], 1024
        $region104: #{tpu_custom_call.1} parent=91 // pred_fallthru
          _
        // Predicated region
        $region105: #{tpu_custom_call.1} parent=91 // pred_check
          %p625 = pneg %p190
        $region106: #{tpu_custom_call.1} parent=91 // pred_check_branch
          %627 = sbr.rel (%p625) target = $region108
        $region107: #{tpu_custom_call.1} parent=91 // pred_region
          %628 = dma.done [#allocation9], 1024
        $region108: #{tpu_custom_call.1} parent=91 // pred_fallthru
          _
        // Predicated region
        $region109: #{tpu_custom_call.1} parent=91 // pred_check
          %p629 = pneg %p232
        $region110: #{tpu_custom_call.1} parent=91 // pred_check_branch
          %631 = sbr.rel (%p629) target = $region112
        $region111: #{tpu_custom_call.1} parent=91 // pred_region
          %632 = dma.done [#allocation9], 1024
        $region112: #{tpu_custom_call.1} parent=91 // pred_fallthru
          _
        // Predicated region
        $region113: #{tpu_custom_call.1} parent=91 // pred_check
          %p633 = pneg %p316
        $region114: #{tpu_custom_call.1} parent=91 // pred_check_branch
          %635 = sbr.rel (%p633) target = $region116
        $region115: #{tpu_custom_call.1} parent=91 // pred_region
          %636 = dma.done [#allocation12], 2048
        $region116: #{tpu_custom_call.1} parent=91 // pred_fallthru
          _
        // Predicated region
        $region117: #{tpu_custom_call.1} parent=91 // pred_check
          %p637 = pneg %p358
        $region118: #{tpu_custom_call.1} parent=91 // pred_check_branch
          %639 = sbr.rel (%p637) target = $region120
        $region119: #{tpu_custom_call.1} parent=91 // pred_region
          %640 = dma.done [#allocation12], 2048
        $region120: #{tpu_custom_call.1} parent=91 // pred_fallthru
          _
        %s641 = sand.u32 %s46, 1
        %s642 = scalar_lea.sflag [#allocation3], %s641
        %s643 = sand.u32 %s46, 1
        %s644 = smul.addr %s643, 16
        %s645 = scalar_lea.vmem [#allocation2], %s644
        %p646 = pneg %p59
        %p647 = pneg %p56
        %p648 = scmp.lt.s32.totalorder %s38, 1
        %s649 = scalar_select %p648, %s38, 1
        %s650 = scalar_lea.vmem %s1, %s649
        %p651 = pneg %p85
        %p652 = pneg %p82
        %p653 = pneg %p106
        %p654 = pneg %p103
        %p655 = pneg %p127
        %p656 = pneg %p124
        %p657 = pneg %p148
        %p658 = pneg %p145
        %p659 = pneg %p169
        %p660 = pneg %p166
        %p661 = pneg %p190
        %p662 = pneg %p187
        %p663 = pneg %p211
        %p664 = pneg %p208
        %p665 = pneg %p232
        %p666 = pneg %p229
        %p667 = pneg %p253
        %p668 = pneg %p250
        %p669 = pneg %p274
        %p670 = pneg %p271
        %p671 = pneg %p295
        %p672 = pneg %p292
        %p673 = pneg %p316
        %p674 = pneg %p313
        %p675 = pneg %p337
        %p676 = pneg %p334
        %p677 = pneg %p358
        %p678 = pneg %p355
        %p679 = pneg %p379
        %p680 = pneg %p376
        %p681 = pneg %p400
        %p682 = pneg %p397
        %p683 = pneg %p421
        %p684 = pneg %p418
        %p685 = pneg %p447
        %p686 = pneg %p444
        %s687 = sand.u32 %s434, 1
        %s688 = scalar_lea.sflag [#allocation4], %s687
        %s689 = sand.u32 %s434, 1
        %s690 = smul.addr %s689, 16
        %s691 = scalar_lea.vmem [#allocation14], %s690
        %p692 = scmp.lt.s32.totalorder %s38, 1
        %s693 = scalar_select %p692, %s38, 1
        %s694 = scalar_lea.vmem %s1, %s693
        %v696 = vld [vmem:[%s612] sm:$0xff]
        %v697 = vld [vmem:[%s612 + $0x8] sm:$0xff]
        %v698 = vld [vmem:[%s694] sm:$0x1]
        %v699 = vld [vmem:[#allocation5] sm:$0xf]
        %v700 = vld [vmem:[#allocation5 + $0x4] sm:$0xf]
        %v701 = vld [vmem:[#allocation5 + $0x8] sm:$0xf]
        %v702 = vld [vmem:[#allocation5 + $0xc] sm:$0xf]
        %v703 = vld [vmem:[#allocation5 + $0x10] sm:$0xf]
        %v704 = vld [vmem:[#allocation5 + $0x14] sm:$0xf]
        %v705 = vld [vmem:[#allocation5 + $0x18] sm:$0xf]
        %v706 = vld [vmem:[#allocation5 + $0x1c] sm:$0xf]
        %v707 = vld [vmem:[#allocation5 + $0x20] sm:$0xf]
        %v708 = vld [vmem:[#allocation5 + $0x24] sm:$0xf]
        %v709 = vld [vmem:[#allocation5 + $0x28] sm:$0xf]
        %v710 = vld [vmem:[#allocation5 + $0x2c] sm:$0xf]
        %v711 = vld [vmem:[#allocation5 + $0x30] sm:$0xf]
        %v712 = vld [vmem:[#allocation5 + $0x34] sm:$0xf]
        %v713 = vld [vmem:[#allocation5 + $0x38] sm:$0xf]
        %v714 = vld [vmem:[#allocation5 + $0x3c] sm:$0xf]
        %v715 = vld [vmem:[%s3] sm:$0x1]
        %v716 = vld [vmem:[#allocation7] sm:$0xf]
        %v717 = vld [vmem:[#allocation7 + $0x4] sm:$0xf]
        %v718 = vld [vmem:[#allocation7 + $0x8] sm:$0xf]
        %v719 = vld [vmem:[#allocation7 + $0xc] sm:$0xf]
        %v720 = vld [vmem:[#allocation7 + $0x10] sm:$0xf]
        %v721 = vld [vmem:[#allocation7 + $0x14] sm:$0xf]
        %v722 = vld [vmem:[#allocation7 + $0x18] sm:$0xf]
        %v723 = vld [vmem:[#allocation7 + $0x1c] sm:$0xf]
        %v724 = vld [vmem:[#allocation7 + $0x20] sm:$0xf]
        %v725 = vld [vmem:[#allocation7 + $0x24] sm:$0xf]
        %v726 = vld [vmem:[#allocation7 + $0x28] sm:$0xf]
        %v727 = vld [vmem:[#allocation7 + $0x2c] sm:$0xf]
        %v728 = vld [vmem:[#allocation7 + $0x30] sm:$0xf]
        %v729 = vld [vmem:[#allocation7 + $0x34] sm:$0xf]
        %v730 = vld [vmem:[#allocation7 + $0x38] sm:$0xf]
        %v731 = vld [vmem:[#allocation7 + $0x3c] sm:$0xf]
        %v732 = vld [vmem:[%s5] sm:$0x1]
        %v733 = vld [vmem:[#allocation8] sm:$0xf]
        %v734 = vld [vmem:[#allocation8 + $0x4] sm:$0xf]
        %v735 = vld [vmem:[#allocation8 + $0x8] sm:$0xf]
        %v736 = vld [vmem:[#allocation8 + $0xc] sm:$0xf]
        %v737 = vld [vmem:[#allocation8 + $0x10] sm:$0xf]
        %v738 = vld [vmem:[#allocation8 + $0x14] sm:$0xf]
        %v739 = vld [vmem:[#allocation8 + $0x18] sm:$0xf]
        %v740 = vld [vmem:[#allocation8 + $0x1c] sm:$0xf]
        %v741 = vld [vmem:[#allocation8 + $0x20] sm:$0xf]
        %v742 = vld [vmem:[#allocation8 + $0x24] sm:$0xf]
        %v743 = vld [vmem:[#allocation8 + $0x28] sm:$0xf]
        %v744 = vld [vmem:[#allocation8 + $0x2c] sm:$0xf]
        %v745 = vld [vmem:[#allocation8 + $0x30] sm:$0xf]
        %v746 = vld [vmem:[#allocation8 + $0x34] sm:$0xf]
        %v747 = vld [vmem:[#allocation8 + $0x38] sm:$0xf]
        %v748 = vld [vmem:[#allocation8 + $0x3c] sm:$0xf]
        %v749 = vld [vmem:[%s7] sm:$0x1]
        %v750 = vld [vmem:[#allocation10] sm:$0xf]
        %v751 = vld [vmem:[#allocation10 + $0x4] sm:$0xf]
        %v752 = vld [vmem:[#allocation10 + $0x8] sm:$0xf]
        %v753 = vld [vmem:[#allocation10 + $0xc] sm:$0xf]
        %v754 = vld [vmem:[#allocation10 + $0x10] sm:$0xf]
        %v755 = vld [vmem:[#allocation10 + $0x14] sm:$0xf]
        %v756 = vld [vmem:[#allocation10 + $0x18] sm:$0xf]
        %v757 = vld [vmem:[#allocation10 + $0x1c] sm:$0xf]
        %v758 = vld [vmem:[#allocation10 + $0x20] sm:$0xf]
        %v759 = vld [vmem:[#allocation10 + $0x24] sm:$0xf]
        %v760 = vld [vmem:[#allocation10 + $0x28] sm:$0xf]
        %v761 = vld [vmem:[#allocation10 + $0x2c] sm:$0xf]
        %v762 = vld [vmem:[#allocation10 + $0x30] sm:$0xf]
        %v763 = vld [vmem:[#allocation10 + $0x34] sm:$0xf]
        %v764 = vld [vmem:[#allocation10 + $0x38] sm:$0xf]
        %v765 = vld [vmem:[#allocation10 + $0x3c] sm:$0xf]
        %v766 = vld [vmem:[%s9] sm:$0x1]
        %v767 = vld [vmem:[%s10] sm:$0x1]
        %v768 = vld [vmem:[%s11] sm:$0x1]
        %v769 = vld [vmem:[#allocation11] sm:$0xff]
        %v770 = vld [vmem:[#allocation11 + $0x8] sm:$0xff]
        %v771 = vld [vmem:[#allocation11 + $0x10] sm:$0xff]
        %v772 = vld [vmem:[#allocation11 + $0x18] sm:$0xff]
        %v773 = vld [vmem:[#allocation11 + $0x20] sm:$0xff]
        %v774 = vld [vmem:[#allocation11 + $0x28] sm:$0xff]
        %v775 = vld [vmem:[#allocation11 + $0x30] sm:$0xff]
        %v776 = vld [vmem:[#allocation11 + $0x38] sm:$0xff]
        %v777 = vld [vmem:[#allocation11 + $0x40] sm:$0xff]
        %v778 = vld [vmem:[#allocation11 + $0x48] sm:$0xff]
        %v779 = vld [vmem:[#allocation11 + $0x50] sm:$0xff]
        %v780 = vld [vmem:[#allocation11 + $0x58] sm:$0xff]
        %v781 = vld [vmem:[#allocation11 + $0x60] sm:$0xff]
        %v782 = vld [vmem:[#allocation11 + $0x68] sm:$0xff]
        %v783 = vld [vmem:[#allocation11 + $0x70] sm:$0xff]
        %v784 = vld [vmem:[#allocation11 + $0x78] sm:$0xff]
        %v785 = vld [vmem:[%s13] sm:$0x3]
        %v786 = vld [vmem:[#allocation13] sm:$0xf]
        %v787 = vld [vmem:[#allocation13 + $0x4] sm:$0xf]
        %v788 = vld [vmem:[#allocation13 + $0x8] sm:$0xf]
        %v789 = vld [vmem:[#allocation13 + $0xc] sm:$0xf]
        %v790 = vld [vmem:[#allocation13 + $0x10] sm:$0xf]
        %v791 = vld [vmem:[#allocation13 + $0x14] sm:$0xf]
        %v792 = vld [vmem:[#allocation13 + $0x18] sm:$0xf]
        %v793 = vld [vmem:[#allocation13 + $0x1c] sm:$0xf]
        %v794 = vld [vmem:[#allocation13 + $0x20] sm:$0xf]
        %v795 = vld [vmem:[#allocation13 + $0x24] sm:$0xf]
        %v796 = vld [vmem:[#allocation13 + $0x28] sm:$0xf]
        %v797 = vld [vmem:[#allocation13 + $0x2c] sm:$0xf]
        %v798 = vld [vmem:[#allocation13 + $0x30] sm:$0xf]
        %v799 = vld [vmem:[#allocation13 + $0x34] sm:$0xf]
        %v800 = vld [vmem:[#allocation13 + $0x38] sm:$0xf]
        %v801 = vld [vmem:[#allocation13 + $0x3c] sm:$0xf]
        %v802 = vld [vmem:[#allocation13 + $0x40] sm:$0xf]
        %v803 = vld [vmem:[#allocation13 + $0x44] sm:$0xf]
        %v804 = vld [vmem:[#allocation13 + $0x48] sm:$0xf]
        %v805 = vld [vmem:[#allocation13 + $0x4c] sm:$0xf]
        %v806 = vld [vmem:[#allocation13 + $0x50] sm:$0xf]
        %v807 = vld [vmem:[#allocation13 + $0x54] sm:$0xf]
        %v808 = vld [vmem:[#allocation13 + $0x58] sm:$0xf]
        %v809 = vld [vmem:[#allocation13 + $0x5c] sm:$0xf]
        %v810 = vld [vmem:[#allocation13 + $0x60] sm:$0xf]
        %v811 = vld [vmem:[#allocation13 + $0x64] sm:$0xf]
        %v812 = vld [vmem:[#allocation13 + $0x68] sm:$0xf]
        %v813 = vld [vmem:[#allocation13 + $0x6c] sm:$0xf]
        %v814 = vld [vmem:[#allocation13 + $0x70] sm:$0xf]
        %v815 = vld [vmem:[#allocation13 + $0x74] sm:$0xf]
        %v816 = vld [vmem:[#allocation13 + $0x78] sm:$0xf]
        %v817 = vld [vmem:[#allocation13 + $0x7c] sm:$0xf]
        %v818 = vld [vmem:[%s15] sm:$0x1]
        %v819 = vld [vmem:[%s16] sm:$0x1]
        %v820 = vld [vmem:[%s17] sm:$0x1]
        %v821 = vpack.c.bf16 %v697, %v696
        %v823 = vlaneseq
        %v824 = vshrl.u32 %v823, 7
        %v825 = vsub.s32 0, %v824
        %v826 = vrot.slane %v715, %v825
        %v844 = vunpack.c.l.b16 %v699
        %v845 = vunpack.c.l.b16 %v700
        %v846 = vunpack.c.l.b16 %v701
        %v847 = vunpack.c.l.b16 %v702
        %v848 = vunpack.c.l.b16 %v703
        %v849 = vunpack.c.l.b16 %v704
        %v850 = vunpack.c.l.b16 %v705
        %v851 = vunpack.c.l.b16 %v706
        %v852 = vunpack.c.l.b16 %v707
        %v853 = vunpack.c.l.b16 %v708
        %v854 = vunpack.c.l.b16 %v709
        %v855 = vunpack.c.l.b16 %v710
        %v856 = vunpack.c.l.b16 %v711
        %v857 = vunpack.c.l.b16 %v712
        %v858 = vunpack.c.l.b16 %v713
        %v859 = vunpack.c.l.b16 %v714
        %v860 = vpack.c.b16 %v845, %v844
        %v861 = vpack.c.b16 %v847, %v846
        %v862 = vpack.c.b16 %v849, %v848
        %v863 = vpack.c.b16 %v851, %v850
        %v864 = vpack.c.b16 %v853, %v852
        %v865 = vpack.c.b16 %v855, %v854
        %v866 = vpack.c.b16 %v857, %v856
        %v867 = vpack.c.b16 %v859, %v858
        %876 = vmatprep.subr.bf16.mxu0 0
        %877 = vmatpush1.bf16.msra.mxu0 %v860
        %878 = vmatprep.subr.bf16.mxu0 0
        %879 = vmatpush1.bf16.msra.mxu0 %v861
        %880 = vmatprep.subr.bf16.mxu0 0
        %881 = vmatpush1.bf16.msra.mxu0 %v862
        %882 = vmatprep.subr.bf16.mxu0 0
        %883 = vmatpush1.bf16.msra.mxu0 %v863
        %884 = vmatprep.subr.bf16.mxu0 0
        %885 = vmatpush1.bf16.msra.mxu0 %v864
        %886 = vmatprep.subr.bf16.mxu0 0
        %887 = vmatpush1.bf16.msra.mxu0 %v865
        %888 = vmatprep.subr.bf16.mxu0 0
        %889 = vmatpush1.bf16.msra.mxu0 %v866
        %890 = vmatprep.subr.bf16.mxu0 0
        %891 = vmatpush1.bf16.msra.mxu0 %v867
        %892 = vmatprep.subr.bf16.mxu0 0
        %893 = vmatpush1.bf16.msra.mxu0 0
        %894 = vmatprep.subr.bf16.mxu0 0
        %895 = vmatpush1.bf16.msra.mxu0 0
        %896 = vmatprep.subr.bf16.mxu0 0
        %897 = vmatpush1.bf16.msra.mxu0 0
        %898 = vmatprep.subr.bf16.mxu0 0
        %899 = vmatpush1.bf16.msra.mxu0 0
        %900 = vmatprep.subr.bf16.mxu0 0
        %901 = vmatpush1.bf16.msra.mxu0 0
        %902 = vmatprep.subr.bf16.mxu0 0
        %903 = vmatpush1.bf16.msra.mxu0 0
        %904 = vmatprep.subr.bf16.mxu0 0
        %905 = vmatpush1.bf16.msra.mxu0 0
        %906 = vmatprep.subr.bf16.mxu0 0
        %907 = vmatpush1.bf16.msra.mxu0 0
        %908 = vmatprep.mubr.bf16.mxu0 0
        %909 = vmatmul.mubr.bf16.gmra.mrb[0].mxu0 %v821
        %v910 = vpop.f32.mrb[0].mxu0
        %v911 = vadd.f32 %v826, %v910
        %v912 = vpop.f32.mrb[0].mxu0
        %v913 = vpop.f32.mrb[0].mxu0
        %v914 = vadd.f32 %v826, %v913
        %v915 = vpop.f32.mrb[0].mxu0
        %916 = vdwg.mxu0
        %v918 = vlaneseq
        %v919 = vshrl.u32 %v918, 7
        %v920 = vsub.s32 0, %v919
        %v921 = vrot.slane %v732, %v920
        %v939 = vunpack.c.l.b16 %v716
        %v940 = vunpack.c.l.b16 %v717
        %v941 = vunpack.c.l.b16 %v718
        %v942 = vunpack.c.l.b16 %v719
        %v943 = vunpack.c.l.b16 %v720
        %v944 = vunpack.c.l.b16 %v721
        %v945 = vunpack.c.l.b16 %v722
        %v946 = vunpack.c.l.b16 %v723
        %v947 = vunpack.c.l.b16 %v724
        %v948 = vunpack.c.l.b16 %v725
        %v949 = vunpack.c.l.b16 %v726
        %v950 = vunpack.c.l.b16 %v727
        %v951 = vunpack.c.l.b16 %v728
        %v952 = vunpack.c.l.b16 %v729
        %v953 = vunpack.c.l.b16 %v730
        %v954 = vunpack.c.l.b16 %v731
        %v955 = vpack.c.b16 %v940, %v939
        %v956 = vpack.c.b16 %v942, %v941
        %v957 = vpack.c.b16 %v944, %v943
        %v958 = vpack.c.b16 %v946, %v945
        %v959 = vpack.c.b16 %v948, %v947
        %v960 = vpack.c.b16 %v950, %v949
        %v961 = vpack.c.b16 %v952, %v951
        %v962 = vpack.c.b16 %v954, %v953
        %971 = vmatprep.subr.bf16.mxu0 0
        %972 = vmatpush1.bf16.msra.mxu0 %v955
        %973 = vmatprep.subr.bf16.mxu0 0
        %974 = vmatpush1.bf16.msra.mxu0 %v956
        %975 = vmatprep.subr.bf16.mxu0 0
        %976 = vmatpush1.bf16.msra.mxu0 %v957
        %977 = vmatprep.subr.bf16.mxu0 0
        %978 = vmatpush1.bf16.msra.mxu0 %v958
        %979 = vmatprep.subr.bf16.mxu0 0
        %980 = vmatpush1.bf16.msra.mxu0 %v959
        %981 = vmatprep.subr.bf16.mxu0 0
        %982 = vmatpush1.bf16.msra.mxu0 %v960
        %983 = vmatprep.subr.bf16.mxu0 0
        %984 = vmatpush1.bf16.msra.mxu0 %v961
        %985 = vmatprep.subr.bf16.mxu0 0
        %986 = vmatpush1.bf16.msra.mxu0 %v962
        %987 = vmatprep.subr.bf16.mxu0 0
        %988 = vmatpush1.bf16.msra.mxu0 0
        %989 = vmatprep.subr.bf16.mxu0 0
        %990 = vmatpush1.bf16.msra.mxu0 0
        %991 = vmatprep.subr.bf16.mxu0 0
        %992 = vmatpush1.bf16.msra.mxu0 0
        %993 = vmatprep.subr.bf16.mxu0 0
        %994 = vmatpush1.bf16.msra.mxu0 0
        %995 = vmatprep.subr.bf16.mxu0 0
        %996 = vmatpush1.bf16.msra.mxu0 0
        %997 = vmatprep.subr.bf16.mxu0 0
        %998 = vmatpush1.bf16.msra.mxu0 0
        %999 = vmatprep.subr.bf16.mxu0 0
        %1000 = vmatpush1.bf16.msra.mxu0 0
        %1001 = vmatprep.subr.bf16.mxu0 0
        %1002 = vmatpush1.bf16.msra.mxu0 0
        %1003 = vmatprep.mubr.bf16.mxu0 0
        %1004 = vmatmul.mubr.bf16.gmra.mrb[0].mxu0 %v821
        %v1005 = vpop.f32.mrb[0].mxu0
        %v1006 = vadd.f32 %v921, %v1005
        %v1007 = vpop.f32.mrb[0].mxu0
        %v1008 = vpop.f32.mrb[0].mxu0
        %v1009 = vadd.f32 %v921, %v1008
        %v1010 = vpop.f32.mrb[0].mxu0
        %1011 = vdwg.mxu0
        %v1013 = vlaneseq
        %v1014 = vshrl.u32 %v1013, 7
        %v1015 = vsub.s32 0, %v1014
        %v1016 = vrot.slane %v749, %v1015
        %v1034 = vunpack.c.l.b16 %v733
        %v1035 = vunpack.c.l.b16 %v734
        %v1036 = vunpack.c.l.b16 %v735
        %v1037 = vunpack.c.l.b16 %v736
        %v1038 = vunpack.c.l.b16 %v737
        %v1039 = vunpack.c.l.b16 %v738
        %v1040 = vunpack.c.l.b16 %v739
        %v1041 = vunpack.c.l.b16 %v740
        %v1042 = vunpack.c.l.b16 %v741
        %v1043 = vunpack.c.l.b16 %v742
        %v1044 = vunpack.c.l.b16 %v743
        %v1045 = vunpack.c.l.b16 %v744
        %v1046 = vunpack.c.l.b16 %v745
        %v1047 = vunpack.c.l.b16 %v746
        %v1048 = vunpack.c.l.b16 %v747
        %v1049 = vunpack.c.l.b16 %v748
        %v1050 = vpack.c.b16 %v1035, %v1034
        %v1051 = vpack.c.b16 %v1037, %v1036
        %v1052 = vpack.c.b16 %v1039, %v1038
        %v1053 = vpack.c.b16 %v1041, %v1040
        %v1054 = vpack.c.b16 %v1043, %v1042
        %v1055 = vpack.c.b16 %v1045, %v1044
        %v1056 = vpack.c.b16 %v1047, %v1046
        %v1057 = vpack.c.b16 %v1049, %v1048
        %1066 = vmatprep.subr.bf16.mxu0 0
        %1067 = vmatpush1.bf16.msra.mxu0 %v1050
        %1068 = vmatprep.subr.bf16.mxu0 0
        %1069 = vmatpush1.bf16.msra.mxu0 %v1051
        %1070 = vmatprep.subr.bf16.mxu0 0
        %1071 = vmatpush1.bf16.msra.mxu0 %v1052
        %1072 = vmatprep.subr.bf16.mxu0 0
        %1073 = vmatpush1.bf16.msra.mxu0 %v1053
        %1074 = vmatprep.subr.bf16.mxu0 0
        %1075 = vmatpush1.bf16.msra.mxu0 %v1054
        %1076 = vmatprep.subr.bf16.mxu0 0
        %1077 = vmatpush1.bf16.msra.mxu0 %v1055
        %1078 = vmatprep.subr.bf16.mxu0 0
        %1079 = vmatpush1.bf16.msra.mxu0 %v1056
        %1080 = vmatprep.subr.bf16.mxu0 0
        %1081 = vmatpush1.bf16.msra.mxu0 %v1057
        %1082 = vmatprep.subr.bf16.mxu0 0
        %1083 = vmatpush1.bf16.msra.mxu0 0
        %1084 = vmatprep.subr.bf16.mxu0 0
        %1085 = vmatpush1.bf16.msra.mxu0 0
        %1086 = vmatprep.subr.bf16.mxu0 0
        %1087 = vmatpush1.bf16.msra.mxu0 0
        %1088 = vmatprep.subr.bf16.mxu0 0
        %1089 = vmatpush1.bf16.msra.mxu0 0
        %1090 = vmatprep.subr.bf16.mxu0 0
        %1091 = vmatpush1.bf16.msra.mxu0 0
        %1092 = vmatprep.subr.bf16.mxu0 0
        %1093 = vmatpush1.bf16.msra.mxu0 0
        %1094 = vmatprep.subr.bf16.mxu0 0
        %1095 = vmatpush1.bf16.msra.mxu0 0
        %1096 = vmatprep.subr.bf16.mxu0 0
        %1097 = vmatpush1.bf16.msra.mxu0 0
        %1098 = vmatprep.mubr.bf16.mxu0 0
        %1099 = vmatmul.mubr.bf16.gmra.mrb[0].mxu0 %v821
        %v1100 = vpop.f32.mrb[0].mxu0
        %v1101 = vadd.f32 %v1016, %v1100
        %v1102 = vpop.f32.mrb[0].mxu0
        %v1103 = vpop.f32.mrb[0].mxu0
        %v1104 = vadd.f32 %v1016, %v1103
        %v1105 = vpop.f32.mrb[0].mxu0
        %1106 = vdwg.mxu0
        %v1107 = vpack.c.bf16 %v914, %v911
        %v1108 = vpack.c.bf16 %v1009, %v1006
        %vm1109 = vcmask 261120
        %v1111 = vsel %vm1109, %v1107, 0
        %v1114 = vsel %vm1109, %v1108, 0
        %1116 = vmatprep.subr.bf16.mxu0 0
        %1117 = vmatpush1.bf16.xpose.msra.mxu0 %v1114
        %1118 = vmatprep.subr.bf16.mxu0 0
        %1119 = vmatpush1.bf16.xpose.msra.mxu0 0
        %1120 = vmatprep.subr.bf16.mxu0 0
        %1121 = vmatpush1.bf16.xpose.msra.mxu0 0
        %1122 = vmatprep.subr.bf16.mxu0 0
        %1123 = vmatpush1.bf16.xpose.msra.mxu0 0
        %1124 = vmatprep.subr.bf16.mxu0 0
        %1125 = vmatpush1.bf16.xpose.msra.mxu0 0
        %1126 = vmatprep.subr.bf16.mxu0 0
        %1127 = vmatpush1.bf16.xpose.msra.mxu0 0
        %1128 = vmatprep.subr.bf16.mxu0 0
        %1129 = vmatpush1.bf16.xpose.msra.mxu0 0
        %1130 = vmatprep.subr.bf16.mxu0 0
        %1131 = vmatpush1.bf16.xpose.msra.mxu0 0
        %1132 = vmatprep.subr.bf16.mxu0 0
        %1133 = vmatpush1.bf16.xpose.msra.mxu0 0
        %1134 = vmatprep.subr.bf16.mxu0 0
        %1135 = vmatpush1.bf16.xpose.msra.mxu0 0
        %1136 = vmatprep.subr.bf16.mxu0 0
        %1137 = vmatpush1.bf16.xpose.msra.mxu0 0
        %1138 = vmatprep.subr.bf16.mxu0 0
        %1139 = vmatpush1.bf16.xpose.msra.mxu0 0
        %1140 = vmatprep.subr.bf16.mxu0 0
        %1141 = vmatpush1.bf16.xpose.msra.mxu0 0
        %1142 = vmatprep.subr.bf16.mxu0 0
        %1143 = vmatpush1.bf16.xpose.msra.mxu0 0
        %1144 = vmatprep.subr.bf16.mxu0 0
        %1145 = vmatpush1.bf16.xpose.msra.mxu0 0
        %1146 = vmatprep.subr.bf16.mxu0 0
        %1147 = vmatpush1.bf16.xpose.msra.mxu0 0
        %1148 = vmatprep.mubr.bf16.mxu0 0
        %1149 = vmatmul.mubr.bf16.gmra.mrb[0].mxu0 %v1111
        %v1150 = vpop.f32.mrb[0].mxu0
        %v1151 = vadd.f32 0.0, %v1150
        %v1152 = vpop.f32.mrb[0].mxu0
        %v1153 = vpop.f32.mrb[0].mxu0
        %v1154 = vadd.f32 0.0, %v1153
        %v1155 = vpop.f32.mrb[0].mxu0
        %1156 = vdwg.mxu0
        %v1157 = vmul.f32 %v1151, 0.17677669
        %v1158 = vmul.f32 %v1154, 0.17677669
        %v1160 = vlaneseq
        %v1161 = vshrl.u32 %v1160, 7
        %v1162 = vsub.s32 0, %v1161
        %v1163 = vrot.slane %v698, %v1162
        %v1165 = vadd.f32 %v1157, %v1163
        %v1166 = vadd.f32 %v1158, %v1163
        %vm1167 = vcmask 130048
        %v1168 = vsel %vm1167, %v1165, -inf
        %1169 = vmax.xlane.f32.xlu0 %v1168
        %v1170 = vpop.xlane.xlu0 %1169
        %v1171 = vsel %vm1167, %v1166, -inf
        %1172 = vmax.xlane.f32.xlu0 %v1171
        %v1173 = vpop.xlane.xlu0 %1172
        %v1174 = vsub.f32 %v1165, %v1170
        %v1175 = vsub.f32 %v1166, %v1173
        %v1176 = vmul.f32 %v1174, 1.442695
        %v1177 = vpow.pop %v1176
        %v1178 = vmul.f32 %v1175, 1.442695
        %v1179 = vpow.pop %v1178
        %v1180 = vsel %vm1167, %v1177, 0.0
        %1181 = vadd.xlane.f32.xlu0 %v1180
        %v1182 = vpop.xlane.xlu0 %1181
        %v1183 = vsel %vm1167, %v1179, 0.0
        %1184 = vadd.xlane.f32.xlu0 %v1183
        %v1185 = vpop.xlane.xlu0 %1184
        %v1186 = vrcp.pop %v1182
        %v1187 = vmul.f32 %v1177, %v1186
        %v1188 = vrcp.pop %v1185
        %v1189 = vmul.f32 %v1179, %v1188
        %v1190 = vpack.c.bf16 %v1189, %v1187
        %v1191 = vpack.c.bf16 %v1104, %v1101
        %v1193 = vsel %vm1167, %v1190, 0
        %1195 = vmatprep.subr.bf16.mxu0 0
        %1196 = vmatpush1.bf16.msra.mxu0 %v1191
        %1197 = vmatprep.subr.bf16.mxu0 0
        %1198 = vmatpush1.bf16.msra.mxu0 0
        %1199 = vmatprep.subr.bf16.mxu0 0
        %1200 = vmatpush1.bf16.msra.mxu0 0
        %1201 = vmatprep.subr.bf16.mxu0 0
        %1202 = vmatpush1.bf16.msra.mxu0 0
        %1203 = vmatprep.subr.bf16.mxu0 0
        %1204 = vmatpush1.bf16.msra.mxu0 0
        %1205 = vmatprep.subr.bf16.mxu0 0
        %1206 = vmatpush1.bf16.msra.mxu0 0
        %1207 = vmatprep.subr.bf16.mxu0 0
        %1208 = vmatpush1.bf16.msra.mxu0 0
        %1209 = vmatprep.subr.bf16.mxu0 0
        %1210 = vmatpush1.bf16.msra.mxu0 0
        %1211 = vmatprep.subr.bf16.mxu0 0
        %1212 = vmatpush1.bf16.msra.mxu0 0
        %1213 = vmatprep.subr.bf16.mxu0 0
        %1214 = vmatpush1.bf16.msra.mxu0 0
        %1215 = vmatprep.subr.bf16.mxu0 0
        %1216 = vmatpush1.bf16.msra.mxu0 0
        %1217 = vmatprep.subr.bf16.mxu0 0
        %1218 = vmatpush1.bf16.msra.mxu0 0
        %1219 = vmatprep.subr.bf16.mxu0 0
        %1220 = vmatpush1.bf16.msra.mxu0 0
        %1221 = vmatprep.subr.bf16.mxu0 0
        %1222 = vmatpush1.bf16.msra.mxu0 0
        %1223 = vmatprep.subr.bf16.mxu0 0
        %1224 = vmatpush1.bf16.msra.mxu0 0
        %1225 = vmatprep.subr.bf16.mxu0 0
        %1226 = vmatpush1.bf16.msra.mxu0 0
        %1227 = vmatprep.mubr.bf16.mxu0 0
        %1228 = vmatmul.mubr.bf16.gmra.mrb[0].mxu0 %v1193
        %v1229 = vpop.f32.mrb[0].mxu0
        %v1230 = vadd.f32 0.0, %v1229
        %v1231 = vpop.f32.mrb[0].mxu0
        %v1232 = vpop.f32.mrb[0].mxu0
        %v1233 = vadd.f32 0.0, %v1232
        %v1234 = vpop.f32.mrb[0].mxu0
        %1235 = vdwg.mxu0
        %1237 = vrot.lane.b32.xlu0 %v1107, 96
        %v1238 = vpop.permute.xlu0 %1237
        %1240 = vrot.lane.b32.xlu0 %v1108, 96
        %v1241 = vpop.permute.xlu0 %1240
        %v1243 = vsel %vm1109, %v1238, 0
        %v1246 = vsel %vm1109, %v1241, 0
        %1248 = vmatprep.subr.bf16.mxu0 0
        %1249 = vmatpush1.bf16.xpose.msra.mxu0 %v1246
        %1250 = vmatprep.subr.bf16.mxu0 0
        %1251 = vmatpush1.bf16.xpose.msra.mxu0 0
        %1252 = vmatprep.subr.bf16.mxu0 0
        %1253 = vmatpush1.bf16.xpose.msra.mxu0 0
        %1254 = vmatprep.subr.bf16.mxu0 0
        %1255 = vmatpush1.bf16.xpose.msra.mxu0 0
        %1256 = vmatprep.subr.bf16.mxu0 0
        %1257 = vmatpush1.bf16.xpose.msra.mxu0 0
        %1258 = vmatprep.subr.bf16.mxu0 0
        %1259 = vmatpush1.bf16.xpose.msra.mxu0 0
        %1260 = vmatprep.subr.bf16.mxu0 0
        %1261 = vmatpush1.bf16.xpose.msra.mxu0 0
        %1262 = vmatprep.subr.bf16.mxu0 0
        %1263 = vmatpush1.bf16.xpose.msra.mxu0 0
        %1264 = vmatprep.subr.bf16.mxu0 0
        %1265 = vmatpush1.bf16.xpose.msra.mxu0 0
        %1266 = vmatprep.subr.bf16.mxu0 0
        %1267 = vmatpush1.bf16.xpose.msra.mxu0 0
        %1268 = vmatprep.subr.bf16.mxu0 0
        %1269 = vmatpush1.bf16.xpose.msra.mxu0 0
        %1270 = vmatprep.subr.bf16.mxu0 0
        %1271 = vmatpush1.bf16.xpose.msra.mxu0 0
        %1272 = vmatprep.subr.bf16.mxu0 0
        %1273 = vmatpush1.bf16.xpose.msra.mxu0 0
        %1274 = vmatprep.subr.bf16.mxu0 0
        %1275 = vmatpush1.bf16.xpose.msra.mxu0 0
        %1276 = vmatprep.subr.bf16.mxu0 0
        %1277 = vmatpush1.bf16.xpose.msra.mxu0 0
        %1278 = vmatprep.subr.bf16.mxu0 0
        %1279 = vmatpush1.bf16.xpose.msra.mxu0 0
        %1280 = vmatprep.mubr.bf16.mxu0 0
        %1281 = vmatmul.mubr.bf16.gmra.mrb[0].mxu0 %v1243
        %v1282 = vpop.f32.mrb[0].mxu0
        %v1283 = vadd.f32 0.0, %v1282
        %v1284 = vpop.f32.mrb[0].mxu0
        %v1285 = vpop.f32.mrb[0].mxu0
        %v1286 = vadd.f32 0.0, %v1285
        %v1287 = vpop.f32.mrb[0].mxu0
        %1288 = vdwg.mxu0
        %v1289 = vmul.f32 %v1283, 0.17677669
        %v1290 = vmul.f32 %v1286, 0.17677669
        %v1291 = vadd.f32 %v1289, %v1163
        %v1292 = vadd.f32 %v1290, %v1163
        %v1293 = vsel %vm1167, %v1291, -inf
        %1294 = vmax.xlane.f32.xlu0 %v1293
        %v1295 = vpop.xlane.xlu0 %1294
        %v1296 = vsel %vm1167, %v1292, -inf
        %1297 = vmax.xlane.f32.xlu0 %v1296
        %v1298 = vpop.xlane.xlu0 %1297
        %v1299 = vsub.f32 %v1291, %v1295
        %v1300 = vsub.f32 %v1292, %v1298
        %v1301 = vmul.f32 %v1299, 1.442695
        %v1302 = vpow.pop %v1301
        %v1303 = vmul.f32 %v1300, 1.442695
        %v1304 = vpow.pop %v1303
        %v1305 = vsel %vm1167, %v1302, 0.0
        %1306 = vadd.xlane.f32.xlu0 %v1305
        %v1307 = vpop.xlane.xlu0 %1306
        %v1308 = vsel %vm1167, %v1304, 0.0
        %1309 = vadd.xlane.f32.xlu0 %v1308
        %v1310 = vpop.xlane.xlu0 %1309
        %v1311 = vrcp.pop %v1307
        %v1312 = vmul.f32 %v1302, %v1311
        %v1313 = vrcp.pop %v1310
        %v1314 = vmul.f32 %v1304, %v1313
        %v1315 = vpack.c.bf16 %v1314, %v1312
        %1317 = vrot.lane.b32.xlu0 %v1191, 96
        %v1318 = vpop.permute.xlu0 %1317
        %v1321 = vsel %vm1167, %v1315, 0
        %1323 = vmatprep.subr.bf16.mxu0 0
        %1324 = vmatpush1.bf16.msra.mxu0 %v1318
        %1325 = vmatprep.subr.bf16.mxu0 0
        %1326 = vmatpush1.bf16.msra.mxu0 0
        %1327 = vmatprep.subr.bf16.mxu0 0
        %1328 = vmatpush1.bf16.msra.mxu0 0
        %1329 = vmatprep.subr.bf16.mxu0 0
        %1330 = vmatpush1.bf16.msra.mxu0 0
        %1331 = vmatprep.subr.bf16.mxu0 0
        %1332 = vmatpush1.bf16.msra.mxu0 0
        %1333 = vmatprep.subr.bf16.mxu0 0
        %1334 = vmatpush1.bf16.msra.mxu0 0
        %1335 = vmatprep.subr.bf16.mxu0 0
        %1336 = vmatpush1.bf16.msra.mxu0 0
        %1337 = vmatprep.subr.bf16.mxu0 0
        %1338 = vmatpush1.bf16.msra.mxu0 0
        %1339 = vmatprep.subr.bf16.mxu0 0
        %1340 = vmatpush1.bf16.msra.mxu0 0
        %1341 = vmatprep.subr.bf16.mxu0 0
        %1342 = vmatpush1.bf16.msra.mxu0 0
        %1343 = vmatprep.subr.bf16.mxu0 0
        %1344 = vmatpush1.bf16.msra.mxu0 0
        %1345 = vmatprep.subr.bf16.mxu0 0
        %1346 = vmatpush1.bf16.msra.mxu0 0
        %1347 = vmatprep.subr.bf16.mxu0 0
        %1348 = vmatpush1.bf16.msra.mxu0 0
        %1349 = vmatprep.subr.bf16.mxu0 0
        %1350 = vmatpush1.bf16.msra.mxu0 0
        %1351 = vmatprep.subr.bf16.mxu0 0
        %1352 = vmatpush1.bf16.msra.mxu0 0
        %1353 = vmatprep.subr.bf16.mxu0 0
        %1354 = vmatpush1.bf16.msra.mxu0 0
        %1355 = vmatprep.mubr.bf16.mxu0 0
        %1356 = vmatmul.mubr.bf16.gmra.mrb[0].mxu0 %v1321
        %v1357 = vpop.f32.mrb[0].mxu0
        %v1358 = vadd.f32 0.0, %v1357
        %v1359 = vpop.f32.mrb[0].mxu0
        %v1360 = vpop.f32.mrb[0].mxu0
        %v1361 = vadd.f32 0.0, %v1360
        %v1362 = vpop.f32.mrb[0].mxu0
        %1363 = vdwg.mxu0
        %1364 = vrot.lane.b32.xlu0 %v1107, 64
        %v1365 = vpop.permute.xlu0 %1364
        %1366 = vrot.lane.b32.xlu0 %v1108, 64
        %v1367 = vpop.permute.xlu0 %1366
        %v1369 = vsel %vm1109, %v1365, 0
        %v1372 = vsel %vm1109, %v1367, 0
        %1374 = vmatprep.subr.bf16.mxu0 0
        %1375 = vmatpush1.bf16.xpose.msra.mxu0 %v1372
        %1376 = vmatprep.subr.bf16.mxu0 0
        %1377 = vmatpush1.bf16.xpose.msra.mxu0 0
        %1378 = vmatprep.subr.bf16.mxu0 0
        %1379 = vmatpush1.bf16.xpose.msra.mxu0 0
        %1380 = vmatprep.subr.bf16.mxu0 0
        %1381 = vmatpush1.bf16.xpose.msra.mxu0 0
        %1382 = vmatprep.subr.bf16.mxu0 0
        %1383 = vmatpush1.bf16.xpose.msra.mxu0 0
        %1384 = vmatprep.subr.bf16.mxu0 0
        %1385 = vmatpush1.bf16.xpose.msra.mxu0 0
        %1386 = vmatprep.subr.bf16.mxu0 0
        %1387 = vmatpush1.bf16.xpose.msra.mxu0 0
        %1388 = vmatprep.subr.bf16.mxu0 0
        %1389 = vmatpush1.bf16.xpose.msra.mxu0 0
        %1390 = vmatprep.subr.bf16.mxu0 0
        %1391 = vmatpush1.bf16.xpose.msra.mxu0 0
        %1392 = vmatprep.subr.bf16.mxu0 0
        %1393 = vmatpush1.bf16.xpose.msra.mxu0 0
        %1394 = vmatprep.subr.bf16.mxu0 0
        %1395 = vmatpush1.bf16.xpose.msra.mxu0 0
        %1396 = vmatprep.subr.bf16.mxu0 0
        %1397 = vmatpush1.bf16.xpose.msra.mxu0 0
        %1398 = vmatprep.subr.bf16.mxu0 0
        %1399 = vmatpush1.bf16.xpose.msra.mxu0 0
        %1400 = vmatprep.subr.bf16.mxu0 0
        %1401 = vmatpush1.bf16.xpose.msra.mxu0 0
        %1402 = vmatprep.subr.bf16.mxu0 0
        %1403 = vmatpush1.bf16.xpose.msra.mxu0 0
        %1404 = vmatprep.subr.bf16.mxu0 0
        %1405 = vmatpush1.bf16.xpose.msra.mxu0 0
        %1406 = vmatprep.mubr.bf16.mxu0 0
        %1407 = vmatmul.mubr.bf16.gmra.mrb[0].mxu0 %v1369
        %v1408 = vpop.f32.mrb[0].mxu0
        %v1409 = vadd.f32 0.0, %v1408
        %v1410 = vpop.f32.mrb[0].mxu0
        %v1411 = vpop.f32.mrb[0].mxu0
        %v1412 = vadd.f32 0.0, %v1411
        %v1413 = vpop.f32.mrb[0].mxu0
        %1414 = vdwg.mxu0
        %v1415 = vmul.f32 %v1409, 0.17677669
        %v1416 = vmul.f32 %v1412, 0.17677669
        %v1417 = vadd.f32 %v1415, %v1163
        %v1418 = vadd.f32 %v1416, %v1163
        %v1419 = vsel %vm1167, %v1417, -inf
        %1420 = vmax.xlane.f32.xlu0 %v1419
        %v1421 = vpop.xlane.xlu0 %1420
        %v1422 = vsel %vm1167, %v1418, -inf
        %1423 = vmax.xlane.f32.xlu0 %v1422
        %v1424 = vpop.xlane.xlu0 %1423
        %v1425 = vsub.f32 %v1417, %v1421
        %v1426 = vsub.f32 %v1418, %v1424
        %v1427 = vmul.f32 %v1425, 1.442695
        %v1428 = vpow.pop %v1427
        %v1429 = vmul.f32 %v1426, 1.442695
        %v1430 = vpow.pop %v1429
        %v1431 = vsel %vm1167, %v1428, 0.0
        %1432 = vadd.xlane.f32.xlu0 %v1431
        %v1433 = vpop.xlane.xlu0 %1432
        %v1434 = vsel %vm1167, %v1430, 0.0
        %1435 = vadd.xlane.f32.xlu0 %v1434
        %v1436 = vpop.xlane.xlu0 %1435
        %v1437 = vrcp.pop %v1433
        %v1438 = vmul.f32 %v1428, %v1437
        %v1439 = vrcp.pop %v1436
        %v1440 = vmul.f32 %v1430, %v1439
        %v1441 = vpack.c.bf16 %v1440, %v1438
        %1442 = vrot.lane.b32.xlu0 %v1191, 64
        %v1443 = vpop.permute.xlu0 %1442
        %v1446 = vsel %vm1167, %v1441, 0
        %1448 = vmatprep.subr.bf16.mxu0 0
        %1449 = vmatpush1.bf16.msra.mxu0 %v1443
        %1450 = vmatprep.subr.bf16.mxu0 0
        %1451 = vmatpush1.bf16.msra.mxu0 0
        %1452 = vmatprep.subr.bf16.mxu0 0
        %1453 = vmatpush1.bf16.msra.mxu0 0
        %1454 = vmatprep.subr.bf16.mxu0 0
        %1455 = vmatpush1.bf16.msra.mxu0 0
        %1456 = vmatprep.subr.bf16.mxu0 0
        %1457 = vmatpush1.bf16.msra.mxu0 0
        %1458 = vmatprep.subr.bf16.mxu0 0
        %1459 = vmatpush1.bf16.msra.mxu0 0
        %1460 = vmatprep.subr.bf16.mxu0 0
        %1461 = vmatpush1.bf16.msra.mxu0 0
        %1462 = vmatprep.subr.bf16.mxu0 0
        %1463 = vmatpush1.bf16.msra.mxu0 0
        %1464 = vmatprep.subr.bf16.mxu0 0
        %1465 = vmatpush1.bf16.msra.mxu0 0
        %1466 = vmatprep.subr.bf16.mxu0 0
        %1467 = vmatpush1.bf16.msra.mxu0 0
        %1468 = vmatprep.subr.bf16.mxu0 0
        %1469 = vmatpush1.bf16.msra.mxu0 0
        %1470 = vmatprep.subr.bf16.mxu0 0
        %1471 = vmatpush1.bf16.msra.mxu0 0
        %1472 = vmatprep.subr.bf16.mxu0 0
        %1473 = vmatpush1.bf16.msra.mxu0 0
        %1474 = vmatprep.subr.bf16.mxu0 0
        %1475 = vmatpush1.bf16.msra.mxu0 0
        %1476 = vmatprep.subr.bf16.mxu0 0
        %1477 = vmatpush1.bf16.msra.mxu0 0
        %1478 = vmatprep.subr.bf16.mxu0 0
        %1479 = vmatpush1.bf16.msra.mxu0 0
        %1480 = vmatprep.mubr.bf16.mxu0 0
        %1481 = vmatmul.mubr.bf16.gmra.mrb[0].mxu0 %v1446
        %v1482 = vpop.f32.mrb[0].mxu0
        %v1483 = vadd.f32 0.0, %v1482
        %v1484 = vpop.f32.mrb[0].mxu0
        %v1485 = vpop.f32.mrb[0].mxu0
        %v1486 = vadd.f32 0.0, %v1485
        %v1487 = vpop.f32.mrb[0].mxu0
        %1488 = vdwg.mxu0
        %1489 = vrot.lane.b32.xlu0 %v1107, 32
        %v1490 = vpop.permute.xlu0 %1489
        %1491 = vrot.lane.b32.xlu0 %v1108, 32
        %v1492 = vpop.permute.xlu0 %1491
        %v1494 = vsel %vm1109, %v1490, 0
        %v1497 = vsel %vm1109, %v1492, 0
        %1499 = vmatprep.subr.bf16.mxu0 0
        %1500 = vmatpush1.bf16.xpose.msra.mxu0 %v1497
        %1501 = vmatprep.subr.bf16.mxu0 0
        %1502 = vmatpush1.bf16.xpose.msra.mxu0 0
        %1503 = vmatprep.subr.bf16.mxu0 0
        %1504 = vmatpush1.bf16.xpose.msra.mxu0 0
        %1505 = vmatprep.subr.bf16.mxu0 0
        %1506 = vmatpush1.bf16.xpose.msra.mxu0 0
        %1507 = vmatprep.subr.bf16.mxu0 0
        %1508 = vmatpush1.bf16.xpose.msra.mxu0 0
        %1509 = vmatprep.subr.bf16.mxu0 0
        %1510 = vmatpush1.bf16.xpose.msra.mxu0 0
        %1511 = vmatprep.subr.bf16.mxu0 0
        %1512 = vmatpush1.bf16.xpose.msra.mxu0 0
        %1513 = vmatprep.subr.bf16.mxu0 0
        %1514 = vmatpush1.bf16.xpose.msra.mxu0 0
        %1515 = vmatprep.subr.bf16.mxu0 0
        %1516 = vmatpush1.bf16.xpose.msra.mxu0 0
        %1517 = vmatprep.subr.bf16.mxu0 0
        %1518 = vmatpush1.bf16.xpose.msra.mxu0 0
        %1519 = vmatprep.subr.bf16.mxu0 0
        %1520 = vmatpush1.bf16.xpose.msra.mxu0 0
        %1521 = vmatprep.subr.bf16.mxu0 0
        %1522 = vmatpush1.bf16.xpose.msra.mxu0 0
        %1523 = vmatprep.subr.bf16.mxu0 0
        %1524 = vmatpush1.bf16.xpose.msra.mxu0 0
        %1525 = vmatprep.subr.bf16.mxu0 0
        %1526 = vmatpush1.bf16.xpose.msra.mxu0 0
        %1527 = vmatprep.subr.bf16.mxu0 0
        %1528 = vmatpush1.bf16.xpose.msra.mxu0 0
        %1529 = vmatprep.subr.bf16.mxu0 0
        %1530 = vmatpush1.bf16.xpose.msra.mxu0 0
        %1531 = vmatprep.mubr.bf16.mxu0 0
        %1532 = vmatmul.mubr.bf16.gmra.mrb[0].mxu0 %v1494
        %v1533 = vpop.f32.mrb[0].mxu0
        %v1534 = vadd.f32 0.0, %v1533
        %v1535 = vpop.f32.mrb[0].mxu0
        %v1536 = vpop.f32.mrb[0].mxu0
        %v1537 = vadd.f32 0.0, %v1536
        %v1538 = vpop.f32.mrb[0].mxu0
        %1539 = vdwg.mxu0
        %v1540 = vmul.f32 %v1534, 0.17677669
        %v1541 = vmul.f32 %v1537, 0.17677669
        %v1542 = vadd.f32 %v1540, %v1163
        %v1543 = vadd.f32 %v1541, %v1163
        %v1544 = vsel %vm1167, %v1542, -inf
        %1545 = vmax.xlane.f32.xlu0 %v1544
        %v1546 = vpop.xlane.xlu0 %1545
        %v1547 = vsel %vm1167, %v1543, -inf
        %1548 = vmax.xlane.f32.xlu0 %v1547
        %v1549 = vpop.xlane.xlu0 %1548
        %v1550 = vsub.f32 %v1542, %v1546
        %v1551 = vsub.f32 %v1543, %v1549
        %v1552 = vmul.f32 %v1550, 1.442695
        %v1553 = vpow.pop %v1552
        %v1554 = vmul.f32 %v1551, 1.442695
        %v1555 = vpow.pop %v1554
        %v1556 = vsel %vm1167, %v1553, 0.0
        %1557 = vadd.xlane.f32.xlu0 %v1556
        %v1558 = vpop.xlane.xlu0 %1557
        %v1559 = vsel %vm1167, %v1555, 0.0
        %1560 = vadd.xlane.f32.xlu0 %v1559
        %v1561 = vpop.xlane.xlu0 %1560
        %v1562 = vrcp.pop %v1558
        %v1563 = vmul.f32 %v1553, %v1562
        %v1564 = vrcp.pop %v1561
        %v1565 = vmul.f32 %v1555, %v1564
        %v1566 = vpack.c.bf16 %v1565, %v1563
        %1567 = vrot.lane.b32.xlu0 %v1191, 32
        %v1568 = vpop.permute.xlu0 %1567
        %v1571 = vsel %vm1167, %v1566, 0
        %1573 = vmatprep.subr.bf16.mxu0 0
        %1574 = vmatpush1.bf16.msra.mxu0 %v1568
        %1575 = vmatprep.subr.bf16.mxu0 0
        %1576 = vmatpush1.bf16.msra.mxu0 0
        %1577 = vmatprep.subr.bf16.mxu0 0
        %1578 = vmatpush1.bf16.msra.mxu0 0
        %1579 = vmatprep.subr.bf16.mxu0 0
        %1580 = vmatpush1.bf16.msra.mxu0 0
        %1581 = vmatprep.subr.bf16.mxu0 0
        %1582 = vmatpush1.bf16.msra.mxu0 0
        %1583 = vmatprep.subr.bf16.mxu0 0
        %1584 = vmatpush1.bf16.msra.mxu0 0
        %1585 = vmatprep.subr.bf16.mxu0 0
        %1586 = vmatpush1.bf16.msra.mxu0 0
        %1587 = vmatprep.subr.bf16.mxu0 0
        %1588 = vmatpush1.bf16.msra.mxu0 0
        %1589 = vmatprep.subr.bf16.mxu0 0
        %1590 = vmatpush1.bf16.msra.mxu0 0
        %1591 = vmatprep.subr.bf16.mxu0 0
        %1592 = vmatpush1.bf16.msra.mxu0 0
        %1593 = vmatprep.subr.bf16.mxu0 0
        %1594 = vmatpush1.bf16.msra.mxu0 0
        %1595 = vmatprep.subr.bf16.mxu0 0
        %1596 = vmatpush1.bf16.msra.mxu0 0
        %1597 = vmatprep.subr.bf16.mxu0 0
        %1598 = vmatpush1.bf16.msra.mxu0 0
        %1599 = vmatprep.subr.bf16.mxu0 0
        %1600 = vmatpush1.bf16.msra.mxu0 0
        %1601 = vmatprep.subr.bf16.mxu0 0
        %1602 = vmatpush1.bf16.msra.mxu0 0
        %1603 = vmatprep.subr.bf16.mxu0 0
        %1604 = vmatpush1.bf16.msra.mxu0 0
        %1605 = vmatprep.mubr.bf16.mxu0 0
        %1606 = vmatmul.mubr.bf16.gmra.mrb[0].mxu0 %v1571
        %v1607 = vpop.f32.mrb[0].mxu0
        %v1608 = vadd.f32 0.0, %v1607
        %v1609 = vpop.f32.mrb[0].mxu0
        %v1610 = vpop.f32.mrb[0].mxu0
        %v1611 = vadd.f32 0.0, %v1610
        %v1612 = vpop.f32.mrb[0].mxu0
        %1613 = vdwg.mxu0
        %1616 = vrot.lane.b32.xlu0 %v1358, 32
        %v1617 = vpop.permute.xlu0 %1616
        %1618 = vrot.lane.b32.xlu0 %v1361, 32
        %v1619 = vpop.permute.xlu0 %1618
        %1624 = vrot.lane.b32.xlu0 %v1483, 64
        %v1625 = vpop.permute.xlu0 %1624
        %1626 = vrot.lane.b32.xlu0 %v1486, 64
        %v1627 = vpop.permute.xlu0 %1626
        %1632 = vrot.lane.b32.xlu0 %v1608, 96
        %v1633 = vpop.permute.xlu0 %1632
        %1634 = vrot.lane.b32.xlu0 %v1611, 96
        %v1635 = vpop.permute.xlu0 %1634
        %v1638 = vsel %vm1109, %v1230, %v1617
        %v1639 = vsel %vm1109, %v1233, %v1619
        %vm1640 = vcmask 523264
        %v1641 = vsel %vm1640, %v1638, %v1625
        %v1642 = vsel %vm1640, %v1639, %v1627
        %vm1643 = vcmask 785408
        %v1644 = vsel %vm1643, %v1641, %v1633
        %v1645 = vsel %vm1643, %v1642, %v1635
        %v1646 = vpack.c.bf16 %v1645, %v1644
        %v1648 = vlaneseq
        %v1649 = vshrl.u32 %v1648, 7
        %v1650 = vsub.s32 0, %v1649
        %v1651 = vrot.slane %v766, %v1650
        %v1669 = vunpack.c.l.b16 %v750
        %v1670 = vunpack.c.l.b16 %v751
        %v1671 = vunpack.c.l.b16 %v752
        %v1672 = vunpack.c.l.b16 %v753
        %v1673 = vunpack.c.l.b16 %v754
        %v1674 = vunpack.c.l.b16 %v755
        %v1675 = vunpack.c.l.b16 %v756
        %v1676 = vunpack.c.l.b16 %v757
        %v1677 = vunpack.c.l.b16 %v758
        %v1678 = vunpack.c.l.b16 %v759
        %v1679 = vunpack.c.l.b16 %v760
        %v1680 = vunpack.c.l.b16 %v761
        %v1681 = vunpack.c.l.b16 %v762
        %v1682 = vunpack.c.l.b16 %v763
        %v1683 = vunpack.c.l.b16 %v764
        %v1684 = vunpack.c.l.b16 %v765
        %v1685 = vpack.c.b16 %v1670, %v1669
        %v1686 = vpack.c.b16 %v1672, %v1671
        %v1687 = vpack.c.b16 %v1674, %v1673
        %v1688 = vpack.c.b16 %v1676, %v1675
        %v1689 = vpack.c.b16 %v1678, %v1677
        %v1690 = vpack.c.b16 %v1680, %v1679
        %v1691 = vpack.c.b16 %v1682, %v1681
        %v1692 = vpack.c.b16 %v1684, %v1683
        %1701 = vmatprep.subr.bf16.mxu0 0
        %1702 = vmatpush1.bf16.msra.mxu0 %v1685
        %1703 = vmatprep.subr.bf16.mxu0 0
        %1704 = vmatpush1.bf16.msra.mxu0 %v1686
        %1705 = vmatprep.subr.bf16.mxu0 0
        %1706 = vmatpush1.bf16.msra.mxu0 %v1687
        %1707 = vmatprep.subr.bf16.mxu0 0
        %1708 = vmatpush1.bf16.msra.mxu0 %v1688
        %1709 = vmatprep.subr.bf16.mxu0 0
        %1710 = vmatpush1.bf16.msra.mxu0 %v1689
        %1711 = vmatprep.subr.bf16.mxu0 0
        %1712 = vmatpush1.bf16.msra.mxu0 %v1690
        %1713 = vmatprep.subr.bf16.mxu0 0
        %1714 = vmatpush1.bf16.msra.mxu0 %v1691
        %1715 = vmatprep.subr.bf16.mxu0 0
        %1716 = vmatpush1.bf16.msra.mxu0 %v1692
        %1717 = vmatprep.subr.bf16.mxu0 0
        %1718 = vmatpush1.bf16.msra.mxu0 0
        %1719 = vmatprep.subr.bf16.mxu0 0
        %1720 = vmatpush1.bf16.msra.mxu0 0
        %1721 = vmatprep.subr.bf16.mxu0 0
        %1722 = vmatpush1.bf16.msra.mxu0 0
        %1723 = vmatprep.subr.bf16.mxu0 0
        %1724 = vmatpush1.bf16.msra.mxu0 0
        %1725 = vmatprep.subr.bf16.mxu0 0
        %1726 = vmatpush1.bf16.msra.mxu0 0
        %1727 = vmatprep.subr.bf16.mxu0 0
        %1728 = vmatpush1.bf16.msra.mxu0 0
        %1729 = vmatprep.subr.bf16.mxu0 0
        %1730 = vmatpush1.bf16.msra.mxu0 0
        %1731 = vmatprep.subr.bf16.mxu0 0
        %1732 = vmatpush1.bf16.msra.mxu0 0
        %1733 = vmatprep.mubr.bf16.mxu0 0
        %1734 = vmatmul.mubr.bf16.gmra.mrb[0].mxu0 %v1646
        %v1735 = vpop.f32.mrb[0].mxu0
        %v1736 = vadd.f32 %v1651, %v1735
        %v1737 = vpop.f32.mrb[0].mxu0
        %v1738 = vpop.f32.mrb[0].mxu0
        %v1739 = vadd.f32 %v1651, %v1738
        %v1740 = vpop.f32.mrb[0].mxu0
        %1741 = vdwg.mxu0
        %v1742 = vadd.f32 %v1736, %v696
        %v1743 = vadd.f32 %v1739, %v697
        %1744 = vadd.xlane.f32.xlu0 %v1742
        %v1745 = vpop.xlane.xlu0 %1744
        %1746 = vadd.xlane.f32.xlu0 %v1743
        %v1747 = vpop.xlane.xlu0 %1746
        %v1748 = vrcp.pop 128.0
        %v1749 = vmul.f32 %v1745, %v1748
        %v1750 = vmul.f32 %v1747, %v1748
        %v1751 = vsub.f32 %v1742, %v1749
        %v1752 = vsub.f32 %v1743, %v1750
        %v1753 = vmul.f32 %v1751, %v1751
        %v1754 = vmul.f32 %v1752, %v1752
        %1755 = vadd.xlane.f32.xlu0 %v1753
        %v1756 = vpop.xlane.xlu0 %1755
        %1757 = vadd.xlane.f32.xlu0 %v1754
        %v1758 = vpop.xlane.xlu0 %1757
        %v1759 = vmul.f32 %v1756, %v1748
        %v1760 = vmul.f32 %v1758, %v1748
        %v1761 = vadd.f32 %v1759, 1e-12
        %v1762 = vadd.f32 %v1760, 1e-12
        %v1763 = vrsqrt.pop %v1761
        %v1764 = vrsqrt.pop %v1762
        %v1765 = vmul.f32 %v1751, %v1763
        %v1766 = vmul.f32 %v1752, %v1764
        %v1768 = vlaneseq
        %v1769 = vshrl.u32 %v1768, 7
        %v1770 = vsub.s32 0, %v1769
        %v1771 = vrot.slane %v767, %v1770
        %v1773 = vmul.f32 %v1765, %v1771
        %v1774 = vmul.f32 %v1766, %v1771
        %v1776 = vlaneseq
        %v1777 = vshrl.u32 %v1776, 7
        %v1778 = vsub.s32 0, %v1777
        %v1779 = vrot.slane %v768, %v1778
        %v1781 = vadd.f32 %v1773, %v1779
        %v1782 = vadd.f32 %v1774, %v1779
        %v1783 = vpack.c.bf16 %v1782, %v1781
        %v1785 = vlaneseq
        %v1786 = vshrl.u32 %v1785, 7
        %v1787 = vsub.s32 0, %v1786
        %v1788 = vrot.slane %v785, %v1787
        %v1789 = vlaneseq
        %v1790 = vshrl.u32 %v1789, 7
        %v1791 = vsub.s32 1, %v1790
        %v1792 = vrot.slane %v785, %v1791
        %v1811 = vunpack.c.l.b16 %v769
        %v1812 = vunpack.c.h.b16 %v769
        %v1813 = vunpack.c.l.b16 %v770
        %v1814 = vunpack.c.h.b16 %v770
        %v1815 = vunpack.c.l.b16 %v771
        %v1816 = vunpack.c.h.b16 %v771
        %v1817 = vunpack.c.l.b16 %v772
        %v1818 = vunpack.c.h.b16 %v772
        %v1819 = vunpack.c.l.b16 %v773
        %v1820 = vunpack.c.h.b16 %v773
        %v1821 = vunpack.c.l.b16 %v774
        %v1822 = vunpack.c.h.b16 %v774
        %v1823 = vunpack.c.l.b16 %v775
        %v1824 = vunpack.c.h.b16 %v775
        %v1825 = vunpack.c.l.b16 %v776
        %v1826 = vunpack.c.h.b16 %v776
        %v1827 = vunpack.c.l.b16 %v777
        %v1828 = vunpack.c.h.b16 %v777
        %v1829 = vunpack.c.l.b16 %v778
        %v1830 = vunpack.c.h.b16 %v778
        %v1831 = vunpack.c.l.b16 %v779
        %v1832 = vunpack.c.h.b16 %v779
        %v1833 = vunpack.c.l.b16 %v780
        %v1834 = vunpack.c.h.b16 %v780
        %v1835 = vunpack.c.l.b16 %v781
        %v1836 = vunpack.c.h.b16 %v781
        %v1837 = vunpack.c.l.b16 %v782
        %v1838 = vunpack.c.h.b16 %v782
        %v1839 = vunpack.c.l.b16 %v783
        %v1840 = vunpack.c.h.b16 %v783
        %v1841 = vunpack.c.l.b16 %v784
        %v1842 = vunpack.c.h.b16 %v784
        %v1843 = vpack.c.b16 %v1813, %v1811
        %v1844 = vpack.c.b16 %v1814, %v1812
        %v1845 = vpack.c.b16 %v1817, %v1815
        %v1846 = vpack.c.b16 %v1818, %v1816
        %v1847 = vpack.c.b16 %v1821, %v1819
        %v1848 = vpack.c.b16 %v1822, %v1820
        %v1849 = vpack.c.b16 %v1825, %v1823
        %v1850 = vpack.c.b16 %v1826, %v1824
        %v1851 = vpack.c.b16 %v1829, %v1827
        %v1852 = vpack.c.b16 %v1830, %v1828
        %v1853 = vpack.c.b16 %v1833, %v1831
        %v1854 = vpack.c.b16 %v1834, %v1832
        %v1855 = vpack.c.b16 %v1837, %v1835
        %v1856 = vpack.c.b16 %v1838, %v1836
        %v1857 = vpack.c.b16 %v1841, %v1839
        %v1858 = vpack.c.b16 %v1842, %v1840
        %1875 = vmatprep.subr.bf16.mxu0 %v1844
        %1876 = vmatpush1.bf16.msra.mxu0 %v1843
        %1877 = vmatprep.subr.bf16.mxu0 %v1846
        %1878 = vmatpush1.bf16.msra.mxu0 %v1845
        %1879 = vmatprep.subr.bf16.mxu0 %v1848
        %1880 = vmatpush1.bf16.msra.mxu0 %v1847
        %1881 = vmatprep.subr.bf16.mxu0 %v1850
        %1882 = vmatpush1.bf16.msra.mxu0 %v1849
        %1883 = vmatprep.subr.bf16.mxu0 %v1852
        %1884 = vmatpush1.bf16.msra.mxu0 %v1851
        %1885 = vmatprep.subr.bf16.mxu0 %v1854
        %1886 = vmatpush1.bf16.msra.mxu0 %v1853
        %1887 = vmatprep.subr.bf16.mxu0 %v1856
        %1888 = vmatpush1.bf16.msra.mxu0 %v1855
        %1889 = vmatprep.subr.bf16.mxu0 %v1858
        %1890 = vmatpush1.bf16.msra.mxu0 %v1857
        %1891 = vmatprep.subr.bf16.mxu0 0
        %1892 = vmatpush1.bf16.msra.mxu0 0
        %1893 = vmatprep.subr.bf16.mxu0 0
        %1894 = vmatpush1.bf16.msra.mxu0 0
        %1895 = vmatprep.subr.bf16.mxu0 0
        %1896 = vmatpush1.bf16.msra.mxu0 0
        %1897 = vmatprep.subr.bf16.mxu0 0
        %1898 = vmatpush1.bf16.msra.mxu0 0
        %1899 = vmatprep.subr.bf16.mxu0 0
        %1900 = vmatpush1.bf16.msra.mxu0 0
        %1901 = vmatprep.subr.bf16.mxu0 0
        %1902 = vmatpush1.bf16.msra.mxu0 0
        %1903 = vmatprep.subr.bf16.mxu0 0
        %1904 = vmatpush1.bf16.msra.mxu0 0
        %1905 = vmatprep.subr.bf16.mxu0 0
        %1906 = vmatpush1.bf16.msra.mxu0 0
        %1907 = vmatprep.mubr.bf16.mxu0 0
        %1908 = vmatmul.mubr.bf16.gmra.mrb[0].mxu0 %v1783
        %v1909 = vpop.f32.mrb[0].mxu0
        %v1910 = vadd.f32 %v1788, %v1909
        %v1911 = vpop.f32.mrb[0].mxu0
        %v1912 = vadd.f32 %v1792, %v1911
        %v1913 = vpop.f32.mrb[0].mxu0
        %v1914 = vadd.f32 %v1788, %v1913
        %v1915 = vpop.f32.mrb[0].mxu0
        %v1916 = vadd.f32 %v1792, %v1915
        %1917 = vdwg.mxu0
        %v1918 = vmul.f32 %v1910, 0.5
        %v1919 = vmul.f32 %v1912, 0.5
        %v1920 = vmul.f32 %v1914, 0.5
        %v1921 = vmul.f32 %v1916, 0.5
        %v1922 = vmul.f32 %v1910, 0.044715
        %v1923 = vmul.f32 %v1912, 0.044715
        %v1924 = vmul.f32 %v1914, 0.044715
        %v1925 = vmul.f32 %v1916, 0.044715
        %v1926 = vmul.f32 %v1922, %v1910
        %v1927 = vmul.f32 %v1923, %v1912
        %v1928 = vmul.f32 %v1924, %v1914
        %v1929 = vmul.f32 %v1925, %v1916
        %v1930 = vmul.f32 %v1926, %v1910
        %v1931 = vmul.f32 %v1927, %v1912
        %v1932 = vmul.f32 %v1928, %v1914
        %v1933 = vmul.f32 %v1929, %v1916
        %v1934 = vadd.f32 %v1910, %v1930
        %v1935 = vadd.f32 %v1912, %v1931
        %v1936 = vadd.f32 %v1914, %v1932
        %v1937 = vadd.f32 %v1916, %v1933
        %v1938 = vmul.f32 %v1934, 0.7978846
        %v1939 = vmul.f32 %v1935, 0.7978846
        %v1940 = vmul.f32 %v1936, 0.7978846
        %v1941 = vmul.f32 %v1937, 0.7978846
        %v1942 = vtanh.pop %v1938
        %v1943 = vtanh.pop %v1939
        %v1944 = vtanh.pop %v1940
        %v1945 = vtanh.pop %v1941
        %v1946 = vadd.f32 %v1942, 1.0
        %v1947 = vadd.f32 %v1943, 1.0
        %v1948 = vadd.f32 %v1944, 1.0
        %v1949 = vadd.f32 %v1945, 1.0
        %v1950 = vmul.f32 %v1918, %v1946
        %v1951 = vmul.f32 %v1919, %v1947
        %v1952 = vmul.f32 %v1920, %v1948
        %v1953 = vmul.f32 %v1921, %v1949
        %v1954 = vpack.c.bf16 %v1952, %v1950
        %v1955 = vpack.c.bf16 %v1953, %v1951
        %v1957 = vlaneseq
        %v1958 = vshrl.u32 %v1957, 7
        %v1959 = vsub.s32 0, %v1958
        %v1960 = vrot.slane %v818, %v1959
        %v1994 = vunpack.c.l.b16 %v786
        %v1995 = vunpack.c.l.b16 %v787
        %v1996 = vunpack.c.l.b16 %v788
        %v1997 = vunpack.c.l.b16 %v789
        %v1998 = vunpack.c.l.b16 %v790
        %v1999 = vunpack.c.l.b16 %v791
        %v2000 = vunpack.c.l.b16 %v792
        %v2001 = vunpack.c.l.b16 %v793
        %v2002 = vunpack.c.l.b16 %v794
        %v2003 = vunpack.c.l.b16 %v795
        %v2004 = vunpack.c.l.b16 %v796
        %v2005 = vunpack.c.l.b16 %v797
        %v2006 = vunpack.c.l.b16 %v798
        %v2007 = vunpack.c.l.b16 %v799
        %v2008 = vunpack.c.l.b16 %v800
        %v2009 = vunpack.c.l.b16 %v801
        %v2010 = vunpack.c.l.b16 %v802
        %v2011 = vunpack.c.l.b16 %v803
        %v2012 = vunpack.c.l.b16 %v804
        %v2013 = vunpack.c.l.b16 %v805
        %v2014 = vunpack.c.l.b16 %v806
        %v2015 = vunpack.c.l.b16 %v807
        %v2016 = vunpack.c.l.b16 %v808
        %v2017 = vunpack.c.l.b16 %v809
        %v2018 = vunpack.c.l.b16 %v810
        %v2019 = vunpack.c.l.b16 %v811
        %v2020 = vunpack.c.l.b16 %v812
        %v2021 = vunpack.c.l.b16 %v813
        %v2022 = vunpack.c.l.b16 %v814
        %v2023 = vunpack.c.l.b16 %v815
        %v2024 = vunpack.c.l.b16 %v816
        %v2025 = vunpack.c.l.b16 %v817
        %v2026 = vpack.c.b16 %v1995, %v1994
        %v2027 = vpack.c.b16 %v1997, %v1996
        %v2028 = vpack.c.b16 %v1999, %v1998
        %v2029 = vpack.c.b16 %v2001, %v2000
        %v2030 = vpack.c.b16 %v2003, %v2002
        %v2031 = vpack.c.b16 %v2005, %v2004
        %v2032 = vpack.c.b16 %v2007, %v2006
        %v2033 = vpack.c.b16 %v2009, %v2008
        %v2034 = vpack.c.b16 %v2011, %v2010
        %v2035 = vpack.c.b16 %v2013, %v2012
        %v2036 = vpack.c.b16 %v2015, %v2014
        %v2037 = vpack.c.b16 %v2017, %v2016
        %v2038 = vpack.c.b16 %v2019, %v2018
        %v2039 = vpack.c.b16 %v2021, %v2020
        %v2040 = vpack.c.b16 %v2023, %v2022
        %v2041 = vpack.c.b16 %v2025, %v2024
        %2058 = vmatprep.subr.bf16.mxu0 0
        %2059 = vmatpush1.bf16.msra.mxu0 %v2026
        %2060 = vmatprep.subr.bf16.mxu0 0
        %2061 = vmatpush1.bf16.msra.mxu0 %v2027
        %2062 = vmatprep.subr.bf16.mxu0 0
        %2063 = vmatpush1.bf16.msra.mxu0 %v2028
        %2064 = vmatprep.subr.bf16.mxu0 0
        %2065 = vmatpush1.bf16.msra.mxu0 %v2029
        %2066 = vmatprep.subr.bf16.mxu0 0
        %2067 = vmatpush1.bf16.msra.mxu0 %v2030
        %2068 = vmatprep.subr.bf16.mxu0 0
        %2069 = vmatpush1.bf16.msra.mxu0 %v2031
        %2070 = vmatprep.subr.bf16.mxu0 0
        %2071 = vmatpush1.bf16.msra.mxu0 %v2032
        %2072 = vmatprep.subr.bf16.mxu0 0
        %2073 = vmatpush1.bf16.msra.mxu0 %v2033
        %2074 = vmatprep.subr.bf16.mxu0 0
        %2075 = vmatpush1.bf16.msra.mxu0 %v2034
        %2076 = vmatprep.subr.bf16.mxu0 0
        %2077 = vmatpush1.bf16.msra.mxu0 %v2035
        %2078 = vmatprep.subr.bf16.mxu0 0
        %2079 = vmatpush1.bf16.msra.mxu0 %v2036
        %2080 = vmatprep.subr.bf16.mxu0 0
        %2081 = vmatpush1.bf16.msra.mxu0 %v2037
        %2082 = vmatprep.subr.bf16.mxu0 0
        %2083 = vmatpush1.bf16.msra.mxu0 %v2038
        %2084 = vmatprep.subr.bf16.mxu0 0
        %2085 = vmatpush1.bf16.msra.mxu0 %v2039
        %2086 = vmatprep.subr.bf16.mxu0 0
        %2087 = vmatpush1.bf16.msra.mxu0 %v2040
        %2088 = vmatprep.subr.bf16.mxu0 0
        %2089 = vmatpush1.bf16.msra.mxu0 %v2041
        %2090 = vmatprep.mubr.bf16.mxu0 %v1955
        %2091 = vmatmul.mubr.bf16.gmra.mrb[0].mxu0 %v1954
        %v2092 = vpop.f32.mrb[0].mxu0
        %v2093 = vadd.f32 %v1960, %v2092
        %v2094 = vpop.f32.mrb[0].mxu0
        %v2095 = vpop.f32.mrb[0].mxu0
        %v2096 = vadd.f32 %v1960, %v2095
        %v2097 = vpop.f32.mrb[0].mxu0
        %2098 = vdwg.mxu0
        %v2099 = vadd.f32 %v2093, %v1781
        %v2100 = vadd.f32 %v2096, %v1782
        %2101 = vadd.xlane.f32.xlu0 %v2099
        %v2102 = vpop.xlane.xlu0 %2101
        %2103 = vadd.xlane.f32.xlu0 %v2100
        %v2104 = vpop.xlane.xlu0 %2103
        %v2105 = vmul.f32 %v2102, %v1748
        %v2106 = vmul.f32 %v2104, %v1748
        %v2107 = vsub.f32 %v2099, %v2105
        %v2108 = vsub.f32 %v2100, %v2106
        %v2109 = vmul.f32 %v2107, %v2107
        %v2110 = vmul.f32 %v2108, %v2108
        %2111 = vadd.xlane.f32.xlu0 %v2109
        %v2112 = vpop.xlane.xlu0 %2111
        %2113 = vadd.xlane.f32.xlu0 %v2110
        %v2114 = vpop.xlane.xlu0 %2113
        %v2115 = vmul.f32 %v2112, %v1748
        %v2116 = vmul.f32 %v2114, %v1748
        %v2117 = vadd.f32 %v2115, 1e-12
        %v2118 = vadd.f32 %v2116, 1e-12
        %v2119 = vrsqrt.pop %v2117
        %v2120 = vrsqrt.pop %v2118
        %v2121 = vmul.f32 %v2107, %v2119
        %v2122 = vmul.f32 %v2108, %v2120
        %v2124 = vlaneseq
        %v2125 = vshrl.u32 %v2124, 7
        %v2126 = vsub.s32 0, %v2125
        %v2127 = vrot.slane %v819, %v2126
        %v2129 = vmul.f32 %v2121, %v2127
        %v2130 = vmul.f32 %v2122, %v2127
        %v2132 = vlaneseq
        %v2133 = vshrl.u32 %v2132, 7
        %v2134 = vsub.s32 0, %v2133
        %v2135 = vrot.slane %v820, %v2134
        %v2137 = vadd.f32 %v2129, %v2135
        %v2138 = vadd.f32 %v2130, %v2135
        %2139 = vst [vmem:[%s691] sm:$0xff] %v2137
        %2140 = vst [vmem:[%s691 + $0x8] sm:$0xff] %v2138
        %s2141 = sand.u32 %s434, 1
        %s2142 = scalar_lea.sflag [#allocation4], %s2141
        %s2143 = sand.u32 %s434, 1
        %s2144 = smul.addr %s2143, 16
        %s2145 = scalar_lea.vmem [#allocation14], %s2144
        // Predicated region
        $region121: #{tpu_custom_call.1} parent=91 // pred_check
          %p2146 = pneg %p444
        $region122: #{tpu_custom_call.1} parent=91 // pred_check_branch
          %2148 = sbr.rel (%p2146) target = $region124
        $region123: #{tpu_custom_call.1} parent=91 // pred_region
          %s2150 = ssub.s32 256, 256
          %2151 = vsyncadd %s2142, %s2150
          %s2152 = smul.addr %s38, 2
          %s2153 = smul.addr %s2152, 128
          %s2154 = scalar_lea.hbm %s18, %s2153
          %s2155 = sshll.u32 %s2145, 4
          %s2156 = int_to_ptr.vmem [resolvable:$true] %s2155
          %2161 = dma.vmem_to_hbm [thread:$0]  %s2156, 256, %s2154, %s2142, 128, 128, 8
        $region124: #{tpu_custom_call.1} parent=91 // pred_fallthru
          _
      $region92: #{tpu_custom_call.1} parent=5 // pred_fallthru
        _
      %p2162 = scmp.le.s32.totalorder 2, %s33
      // Predicated region
      $region125: #{tpu_custom_call.1} parent=5 // pred_check
        %p2163 = pneg %p2162
      $region126: #{tpu_custom_call.1} parent=5 // pred_check_branch
        %2165 = sbr.rel (%p2163) target = $region128
      $region127: #{tpu_custom_call.1} parent=5 // pred_region
        %s2166 = ssub.s32 %s33, 2
        // Predicated region
        $region129: #{tpu_custom_call.1} parent=127 // pred_check
          %p2167 = pneg %p450
        $region130: #{tpu_custom_call.1} parent=127 // pred_check_branch
          %2169 = sbr.rel (%p2167) target = $region132
        $region131: #{tpu_custom_call.1} parent=127 // pred_region
          %s2170 = sand.u32 %s435, 1
          %s2171 = scalar_lea.sflag [#allocation4], %s2170
          %s2172 = sand.u32 %s435, 1
          %s2173 = smul.addr %s2172, 16
          %s2174 = scalar_lea.vmem [#allocation14], %s2173
          %2175 = dma.done %s2171, 256
        $region132: #{tpu_custom_call.1} parent=127 // pred_fallthru
          _
      $region128: #{tpu_custom_call.1} parent=5 // pred_fallthru
        _
    $region6: #{tpu_custom_call.1} parent=1 // loop_footer
      %s37 = sadd.s32 1, %s33
    $region7: #{tpu_custom_call.1} parent=1 // loop_footer_branch
      %32 = sbr.rel target = $region3
    $region8: #{tpu_custom_call.1} parent=1 // loop_exit
      _
    %2176 = vsyncpa [#allocation3], 1
    %s2177 = scalar_lea.sflag [#allocation3], 1
    %2178 = vsyncpa %s2177, 1
    %2179 = vsyncpa [#allocation6], 1
    %2180 = vsyncpa [#allocation9], 1
    %2181 = vsyncpa [#allocation12], 1
    %2182 = vsyncpa [#allocation4], 1
    %s2183 = scalar_lea.sflag [#allocation4], 1
    %2184 = vsyncpa %s2183, 1

</llo_original>
